<compile_context>
chip_gen: v5e
topology: v5e:2x2
jax: 0.10.0
libtpu: 0.0.40
codegen_flags: <defaults>
</compile_context>

<pallas_src>
import functools
import math

import jax
import jax.numpy as jnp
from jax import lax
from jax.experimental import pallas as pl
from jax.experimental.pallas import tpu as pltpu

BBOX_XFORM_CLIP = math.log(1000.0 / 16.0)


# ----------------------------------------------------------------------------
# Fused Pallas kernel: conv3x3 + ReLU + fused heads + BoxCoder.decode + sigmoid
# ----------------------------------------------------------------------------
def rpn_fused_pallas(xp, wconv9, bconv, whead_t, bhead, anchors_t, *, A):
    """xp:        (N, H+2, W+2, C) f32  zero-padded NHWC features
       wconv9:    (9, C, C)        bf16 3x3 conv weights, [kh*3+kw, c_in, c_out]
       bconv:     (1, C)           f32
       whead_t:   (5A, C)          bf16 rows = [cls(A); bbox(4A, order 4a+coord)]
       bhead:     (5A, 1)          f32
       anchors_t: (4, A*H*W)       f32  coordinate-major, anchor idx a*H*W+h*W+w
       returns prob (N, A, H*W) f32, prop (N, 4, A*H*W) f32."""
    N, Hp2, Wp2, C = xp.shape
    H, W = Hp2 - 2, Wp2 - 2
    HW = H * W
    M = A * HW

    def kernel(xp_ref, wconv_ref, bconv_ref, whead_ref, bhead_ref, anch_ref,
               prob_ref, prop_ref):
        x = xp_ref[0]                                        # (H+2, W+2, C) f32
        # --- 3x3 conv as 9 shifted matmuls, bf16 MXU operands, f32 accumulate
        h = jnp.zeros((HW, C), jnp.float32)
        for k in range(9):
            kh, kw = k // 3, k % 3
            xs = x[kh:kh + H, kw:kw + W, :].reshape(HW, C).astype(jnp.bfloat16)
            h = h + jnp.dot(xs, wconv_ref[k],
                            preferred_element_type=jnp.float32)
        h = jnp.maximum(h + bconv_ref[...], 0.0)             # bias + ReLU
        # --- fused cls/bbox heads: one NT matmul, output transposed so the
        #     lane dimension is HW (lane-dense downstream stores)
        head_t = lax.dot_general(
            whead_ref[...], h.astype(jnp.bfloat16),
            dimension_numbers=(((1,), (1,)), ((), ())),
            preferred_element_type=jnp.float32)              # (5A, HW)
        head_t = head_t + bhead_ref[...]
        # --- objectness sigmoid: exp + approximate reciprocal (EUP slot)
        cls_t = head_t[0:A, :]                               # (A, HW)
        sig = pl.reciprocal(1.0 + jnp.exp(-cls_t), approx=True)
        prob_ref[...] = sig[None, :, :]
        # --- BoxCoder.decode (weights = (1,1,1,1)) per anchor, lane-dense
        for a in range(A):
            d = head_t[A + 4 * a:A + 4 * a + 4, :]           # dx, dy, dw, dh
            anc = anch_ref[:, a * HW:(a + 1) * HW]           # x1, y1, x2, y2
            widths = anc[2:3] - anc[0:1]
            heights = anc[3:4] - anc[1:2]
            ctr_x = anc[0:1] + 0.5 * widths
            ctr_y = anc[1:2] + 0.5 * heights
            dx = d[0:1]
            dy = d[1:2]
            dw = jnp.minimum(d[2:3], BBOX_XFORM_CLIP)
            dh = jnp.minimum(d[3:4], BBOX_XFORM_CLIP)
            pcx = dx * widths + ctr_x
            pcy = dy * heights + ctr_y
            pw = jnp.exp(dw) * widths
            ph = jnp.exp(dh) * heights
            box = jnp.concatenate([pcx - 0.5 * pw, pcy - 0.5 * ph,
                                   pcx + 0.5 * pw, pcy + 0.5 * ph], axis=0)
            prop_ref[:, :, a * HW:(a + 1) * HW] = box[None, :, :]

    full2 = lambda s: pl.BlockSpec(s, lambda n: (0, 0))
    prob, prop = pl.pallas_call(
        kernel,
        out_shape=(jax.ShapeDtypeStruct((N, A, HW), jnp.float32),
                   jax.ShapeDtypeStruct((N, 4, M), jnp.float32)),
        grid=(N,),
        in_specs=[pl.BlockSpec((1, Hp2, Wp2, C), lambda n: (n, 0, 0, 0)),
                  pl.BlockSpec((9, C, C), lambda n: (0, 0, 0)),
                  full2((1, C)),
                  full2((5 * A, C)),
                  full2((5 * A, 1)),
                  full2((4, M))],
        out_specs=(pl.BlockSpec((1, A, HW), lambda n: (n, 0, 0)),
                   pl.BlockSpec((1, 4, M), lambda n: (n, 0, 0))),
        compiler_params=pltpu.CompilerParams(
            dimension_semantics=("parallel",)),   # grid = N images (>= 2 steps)
    )(xp, wconv9, bconv, whead_t, bhead, anchors_t)
    return prob, prop


# ----------------------------------------------------------------------------
# Anchors: coordinate-major (4, A*H*W), anchor index = a*H*W + h*W + w
# ----------------------------------------------------------------------------
def generate_anchors_t(H, W, stride_y, stride_x, sizes):
    s = jnp.asarray(sizes, jnp.float32)                              # (A,)
    base = jnp.round(jnp.stack([-s / 2.0, -s / 2.0, s / 2.0, s / 2.0],
                               axis=1))                              # (A, 4)
    sx = jnp.arange(W, dtype=jnp.float32) * stride_x
    sy = jnp.arange(H, dtype=jnp.float32) * stride_y
    sy_g, sx_g = jnp.meshgrid(sy, sx, indexing="ij")                 # (H, W)
    shifts = jnp.stack([sx_g, sy_g, sx_g, sy_g], axis=0).reshape(4, H * W)
    anchors = shifts[:, None, :] + base.T[:, :, None]                # (4, A, HW)
    return anchors.reshape(4, -1)


# ----------------------------------------------------------------------------
# Proposal filtering (plain-JAX glue, vmapped over images)
# ----------------------------------------------------------------------------
def nms_fixed(boxes, scores, iou_thresh, max_out):
    """Greedy NMS on score-descending boxes (invalid entries carry -inf).
    Fixed-size, zero-padded outputs + valid count."""
    K = boxes.shape[0]
    valid = scores > -jnp.inf
    areas = (boxes[:, 2] - boxes[:, 0]) * (boxes[:, 3] - boxes[:, 1])
    lt = jnp.maximum(boxes[:, None, :2], boxes[None, :, :2])
    rb = jnp.minimum(boxes[:, None, 2:], boxes[None, :, 2:])
    wh = jnp.clip(rb - lt, 0.0)
    inter = wh[..., 0] * wh[..., 1]
    iou = inter / (areas[:, None] + areas[None, :] - inter + 1e-9)
    idx = jnp.arange(K)

    def body(i, keep):
        earlier = (idx < i) & keep
        suppressed = jnp.any(earlier & (iou[:, i] > iou_thresh))
        return keep.at[i].set(valid[i] & jnp.logical_not(suppressed))

    # TODO(synk): greedy NMS is inherently sequential; a Pallas kernel holding
    # the KxK IoU tile in VMEM would shrink per-step latency further.
    keep = lax.fori_loop(0, K, body, jnp.zeros((K,), dtype=bool))
    kept_scores = jnp.where(keep, scores, -jnp.inf)
    top_scores, top_idx = lax.top_k(kept_scores, max_out)
    out_valid = top_scores > -jnp.inf
    out_boxes = jnp.where(out_valid[:, None], boxes[top_idx], 0.0)
    out_scores = jnp.where(out_valid, top_scores, 0.0)
    count = jnp.minimum(jnp.sum(keep).astype(jnp.int32), max_out)
    return out_boxes, out_scores, count


def filter_proposals(prop_t, obj_prob, image_sizes, *, pre_nms_top_n,
                     post_nms_top_n, nms_thresh, score_thresh, min_size):
    """Single feature level -> batched_nms degenerates to plain NMS.
    Returns zero-padded (N, post, 4) boxes, (N, post) scores, (N,) counts."""
    N, _, M = prop_t.shape
    k = min(pre_nms_top_n, M)
    top_scores, top_idx = lax.top_k(obj_prob, k)                     # (N, k)
    boxes_t = jnp.take_along_axis(prop_t, top_idx[:, None, :], axis=2)

    def per_image(bt, scores, img_hw):
        h, w = img_hw[0], img_hw[1]
        x1 = jnp.clip(bt[0], 0.0, w)
        y1 = jnp.clip(bt[1], 0.0, h)
        x2 = jnp.clip(bt[2], 0.0, w)
        y2 = jnp.clip(bt[3], 0.0, h)
        keep = ((x2 - x1 >= min_size) & (y2 - y1 >= min_size)
                & (scores > score_thresh))
        masked = jnp.where(keep, scores, -jnp.inf)
        boxes = jnp.stack([x1, y1, x2, y2], axis=1)                  # (k, 4)
        return nms_fixed(boxes, masked, nms_thresh, post_nms_top_n)

    return jax.vmap(per_image)(boxes_t, top_scores, image_sizes)


# ----------------------------------------------------------------------------
# RPN forward (inference): fused head/decode kernel -> filter_proposals
# ----------------------------------------------------------------------------
@functools.partial(jax.jit, static_argnames=(
    "A", "pre_nms_top_n", "post_nms_top_n", "nms_thresh", "score_thresh",
    "min_size", "anchor_sizes"))
def rpn_forward(features, params, image_sizes, *, A, pre_nms_top_n=200,
                post_nms_top_n=50, nms_thresh=0.7, score_thresh=0.0,
                min_size=1.0, anchor_sizes=(16.0, 32.0, 64.0)):
    N, C, H, W = features.shape
    HW = H * W

    # NHWC + 1-pixel halo: one cheap pass instead of a 9x im2col copy.
    xp = jnp.pad(jnp.transpose(features, (0, 2, 3, 1)),
                 ((0, 0), (1, 1), (1, 1), (0, 0)))

    # 3x3 conv weights -> (kh*3+kw, c_in, c_out); fused cls/bbox head weights.
    wconv9 = jnp.transpose(params["wconv"], (2, 3, 1, 0)).reshape(9, C, C)
    wconv9 = wconv9.astype(jnp.bfloat16)
    bconv = params["bconv"].reshape(1, C).astype(jnp.float32)
    whead_t = jnp.concatenate([params["wcls"], params["wbox"]],
                              axis=0).astype(jnp.bfloat16)           # (5A, C)
    bhead = jnp.concatenate([params["bcls"], params["bbox"]],
                            axis=0).reshape(5 * A, 1).astype(jnp.float32)

    # Anchors shared across the batch (no jnp.tile, no transposes).
    stride_y = image_sizes[0, 0] / H
    stride_x = image_sizes[0, 1] / W
    anchors_t = generate_anchors_t(H, W, stride_y, stride_x, anchor_sizes)

    prob, prop = rpn_fused_pallas(xp, wconv9, bconv, whead_t, bhead,
                                  anchors_t, A=A)
    obj_prob = prob.reshape(N, A * HW)

    # TODO(synk): torch filter_proposals returns variable-length box lists;
    # here we return post_nms_top_n zero-padded boxes/scores + a valid count.
    boxes, scores, counts = filter_proposals(
        prop, obj_prob, image_sizes,
        pre_nms_top_n=pre_nms_top_n, post_nms_top_n=post_nms_top_n,
        nms_thresh=nms_thresh, score_thresh=score_thresh, min_size=min_size)
    losses = {}   # inference mode: training loss branch not executed
    return boxes, scores, counts, losses


# ----------------------------------------------------------------------------
if __name__ == "__main__":
    key = jax.random.PRNGKey(0)
    k1, k2, k3, k4 = jax.random.split(key, 4)

    N, C, H, W = 2, 16, 16, 16        # batch, channels, feature spatial
    A = 3                             # anchors per location
    img_h = img_w = 128               # original image size (stride = 8)

    features = jax.random.normal(k1, (N, C, H, W), dtype=jnp.float32)

    # RPNHead parameters (torchvision init: N(0, 0.01), zero bias)
    params = {
        "wconv": 0.01 * jax.random.normal(k2, (C, C, 3, 3), dtype=jnp.float32),
        "bconv": jnp.zeros((C,), jnp.float32),
        "wcls": 0.01 * jax.random.normal(k3, (A, C), dtype=jnp.float32),
        "bcls": jnp.zeros((A,), jnp.float32),
        "wbox": 0.01 * jax.random.normal(k4, (4 * A, C), dtype=jnp.float32),
        "bbox": jnp.zeros((4 * A,), jnp.float32),
    }

    image_sizes = jnp.array([[img_h, img_w]] * N, dtype=jnp.float32)

    boxes, scores, counts, losses = rpn_forward(
        features, params, image_sizes, A=A)
    jax.block_until_ready((boxes, scores, counts))

    print("KERNEL_OK")
</pallas_src>

<mosaic_0001>
module attributes {stable_mosaic.version = 11 : i64} {
  func.func @kernel(%arg0: i32, %arg1: memref<1x18x18x16xf32, #tpu.memory_space<vmem>>, %arg2: memref<9x16x16xbf16, #tpu.memory_space<vmem>>, %arg3: memref<1x16xf32, #tpu.memory_space<vmem>>, %arg4: memref<15x16xbf16, #tpu.memory_space<vmem>>, %arg5: memref<15x1xf32, #tpu.memory_space<vmem>>, %arg6: memref<4x768xf32, #tpu.memory_space<vmem>>, %arg7: memref<1x3x256xf32, #tpu.memory_space<vmem>>, %arg8: memref<1x4x768xf32, #tpu.memory_space<vmem>>) attributes {dimension_semantics = [#tpu.dimension_semantics<parallel>], iteration_bounds = array<i64: 2>, scalar_prefetch = 0 : i64, scratch_operands = 0 : i64, tpu.core_type = #tpu.core_type<tc>, window_params = [{transform_indices = @transform_0, window_bounds = array<i64: 1, 18, 18, 16>}, {pipeline_mode = #tpu.pipeline_mode<synchronous>, transform_indices = @transform_1, window_bounds = array<i64: 9, 16, 16>}, {pipeline_mode = #tpu.pipeline_mode<synchronous>, transform_indices = @transform_2, window_bounds = array<i64: 1, 16>}, {pipeline_mode = #tpu.pipeline_mode<synchronous>, transform_indices = @transform_3, window_bounds = array<i64: 15, 16>}, {pipeline_mode = #tpu.pipeline_mode<synchronous>, transform_indices = @transform_4, window_bounds = array<i64: 15, 1>}, {pipeline_mode = #tpu.pipeline_mode<synchronous>, transform_indices = @transform_5, window_bounds = array<i64: 4, 768>}, {transform_indices = @transform_6, window_bounds = array<i64: 1, 3, 256>}, {transform_indices = @transform_7, window_bounds = array<i64: 1, 4, 768>}]} {
    %c0 = arith.constant 0 : index
    %c0_0 = arith.constant 0 : index
    %c0_1 = arith.constant 0 : index
    %c0_2 = arith.constant 0 : index
    %0 = vector.load %arg1[%c0, %c0_0, %c0_1, %c0_2] : memref<1x18x18x16xf32, #tpu.memory_space<vmem>>, vector<1x18x18x16xf32>
    %1 = vector.shape_cast %0 : vector<1x18x18x16xf32> to vector<18x18x16xf32>
    %cst = arith.constant 0.000000e+00 : f32
    %2 = vector.broadcast %cst : f32 to vector<256x16xf32>
    %3 = vector.extract_strided_slice %1 {offsets = [0, 0, 0], sizes = [16, 16, 16], strides = [1, 1, 1]} : vector<18x18x16xf32> to vector<16x16x16xf32>
    %4 = vector.shape_cast %3 : vector<16x16x16xf32> to vector<256x16xf32>
    %5 = arith.truncf %4 : vector<256x16xf32> to vector<256x16xbf16>
    %c0_3 = arith.constant 0 : index
    %c0_4 = arith.constant 0 : index
    %c0_5 = arith.constant 0 : index
    %6 = vector.load %arg2[%c0_3, %c0_4, %c0_5] : memref<9x16x16xbf16, #tpu.memory_space<vmem>>, vector<1x16x16xbf16>
    %7 = vector.shape_cast %6 : vector<1x16x16xbf16> to vector<16x16xbf16>
    %cst_6 = arith.constant dense<0.000000e+00> : vector<256x16xf32>
    %8 = tpu.matmul %5, %7, %cst_6 {dimension_numbers = #tpu.dot_dimension_numbers<[1], [0], [0], [1], [0, 0, 1, 1], [], []>} : vector<256x16xbf16>, vector<16x16xbf16>, vector<256x16xf32> -> vector<256x16xf32>
    %9 = arith.addf %2, %8 : vector<256x16xf32>
    %10 = vector.extract_strided_slice %1 {offsets = [0, 1, 0], sizes = [16, 16, 16], strides = [1, 1, 1]} : vector<18x18x16xf32> to vector<16x16x16xf32>
    %11 = vector.shape_cast %10 : vector<16x16x16xf32> to vector<256x16xf32>
    %12 = arith.truncf %11 : vector<256x16xf32> to vector<256x16xbf16>
    %c1 = arith.constant 1 : index
    %c0_7 = arith.constant 0 : index
    %c0_8 = arith.constant 0 : index
    %13 = vector.load %arg2[%c1, %c0_7, %c0_8] : memref<9x16x16xbf16, #tpu.memory_space<vmem>>, vector<1x16x16xbf16>
    %14 = vector.shape_cast %13 : vector<1x16x16xbf16> to vector<16x16xbf16>
    %cst_9 = arith.constant dense<0.000000e+00> : vector<256x16xf32>
    %15 = tpu.matmul %12, %14, %cst_9 {dimension_numbers = #tpu.dot_dimension_numbers<[1], [0], [0], [1], [0, 0, 1, 1], [], []>} : vector<256x16xbf16>, vector<16x16xbf16>, vector<256x16xf32> -> vector<256x16xf32>
    %16 = arith.addf %9, %15 : vector<256x16xf32>
    %17 = vector.extract_strided_slice %1 {offsets = [0, 2, 0], sizes = [16, 16, 16], strides = [1, 1, 1]} : vector<18x18x16xf32> to vector<16x16x16xf32>
    %18 = vector.shape_cast %17 : vector<16x16x16xf32> to vector<256x16xf32>
    %19 = arith.truncf %18 : vector<256x16xf32> to vector<256x16xbf16>
    %c2 = arith.constant 2 : index
    %c0_10 = arith.constant 0 : index
    %c0_11 = arith.constant 0 : index
    %20 = vector.load %arg2[%c2, %c0_10, %c0_11] : memref<9x16x16xbf16, #tpu.memory_space<vmem>>, vector<1x16x16xbf16>
    %21 = vector.shape_cast %20 : vector<1x16x16xbf16> to vector<16x16xbf16>
    %cst_12 = arith.constant dense<0.000000e+00> : vector<256x16xf32>
    %22 = tpu.matmul %19, %21, %cst_12 {dimension_numbers = #tpu.dot_dimension_numbers<[1], [0], [0], [1], [0, 0, 1, 1], [], []>} : vector<256x16xbf16>, vector<16x16xbf16>, vector<256x16xf32> -> vector<256x16xf32>
    %23 = arith.addf %16, %22 : vector<256x16xf32>
    %24 = vector.extract_strided_slice %1 {offsets = [1, 0, 0], sizes = [16, 16, 16], strides = [1, 1, 1]} : vector<18x18x16xf32> to vector<16x16x16xf32>
    %25 = vector.shape_cast %24 : vector<16x16x16xf32> to vector<256x16xf32>
    %26 = arith.truncf %25 : vector<256x16xf32> to vector<256x16xbf16>
    %c3 = arith.constant 3 : index
    %c0_13 = arith.constant 0 : index
    %c0_14 = arith.constant 0 : index
    %27 = vector.load %arg2[%c3, %c0_13, %c0_14] : memref<9x16x16xbf16, #tpu.memory_space<vmem>>, vector<1x16x16xbf16>
    %28 = vector.shape_cast %27 : vector<1x16x16xbf16> to vector<16x16xbf16>
    %cst_15 = arith.constant dense<0.000000e+00> : vector<256x16xf32>
    %29 = tpu.matmul %26, %28, %cst_15 {dimension_numbers = #tpu.dot_dimension_numbers<[1], [0], [0], [1], [0, 0, 1, 1], [], []>} : vector<256x16xbf16>, vector<16x16xbf16>, vector<256x16xf32> -> vector<256x16xf32>
    %30 = arith.addf %23, %29 : vector<256x16xf32>
    %31 = vector.extract_strided_slice %1 {offsets = [1, 1, 0], sizes = [16, 16, 16], strides = [1, 1, 1]} : vector<18x18x16xf32> to vector<16x16x16xf32>
    %32 = vector.shape_cast %31 : vector<16x16x16xf32> to vector<256x16xf32>
    %33 = arith.truncf %32 : vector<256x16xf32> to vector<256x16xbf16>
    %c4 = arith.constant 4 : index
    %c0_16 = arith.constant 0 : index
    %c0_17 = arith.constant 0 : index
    %34 = vector.load %arg2[%c4, %c0_16, %c0_17] : memref<9x16x16xbf16, #tpu.memory_space<vmem>>, vector<1x16x16xbf16>
    %35 = vector.shape_cast %34 : vector<1x16x16xbf16> to vector<16x16xbf16>
    %cst_18 = arith.constant dense<0.000000e+00> : vector<256x16xf32>
    %36 = tpu.matmul %33, %35, %cst_18 {dimension_numbers = #tpu.dot_dimension_numbers<[1], [0], [0], [1], [0, 0, 1, 1], [], []>} : vector<256x16xbf16>, vector<16x16xbf16>, vector<256x16xf32> -> vector<256x16xf32>
    %37 = arith.addf %30, %36 : vector<256x16xf32>
    %38 = vector.extract_strided_slice %1 {offsets = [1, 2, 0], sizes = [16, 16, 16], strides = [1, 1, 1]} : vector<18x18x16xf32> to vector<16x16x16xf32>
    %39 = vector.shape_cast %38 : vector<16x16x16xf32> to vector<256x16xf32>
    %40 = arith.truncf %39 : vector<256x16xf32> to vector<256x16xbf16>
    %c5 = arith.constant 5 : index
    %c0_19 = arith.constant 0 : index
    %c0_20 = arith.constant 0 : index
    %41 = vector.load %arg2[%c5, %c0_19, %c0_20] : memref<9x16x16xbf16, #tpu.memory_space<vmem>>, vector<1x16x16xbf16>
    %42 = vector.shape_cast %41 : vector<1x16x16xbf16> to vector<16x16xbf16>
    %cst_21 = arith.constant dense<0.000000e+00> : vector<256x16xf32>
    %43 = tpu.matmul %40, %42, %cst_21 {dimension_numbers = #tpu.dot_dimension_numbers<[1], [0], [0], [1], [0, 0, 1, 1], [], []>} : vector<256x16xbf16>, vector<16x16xbf16>, vector<256x16xf32> -> vector<256x16xf32>
    %44 = arith.addf %37, %43 : vector<256x16xf32>
    %45 = vector.extract_strided_slice %1 {offsets = [2, 0, 0], sizes = [16, 16, 16], strides = [1, 1, 1]} : vector<18x18x16xf32> to vector<16x16x16xf32>
    %46 = vector.shape_cast %45 : vector<16x16x16xf32> to vector<256x16xf32>
    %47 = arith.truncf %46 : vector<256x16xf32> to vector<256x16xbf16>
    %c6 = arith.constant 6 : index
    %c0_22 = arith.constant 0 : index
    %c0_23 = arith.constant 0 : index
    %48 = vector.load %arg2[%c6, %c0_22, %c0_23] : memref<9x16x16xbf16, #tpu.memory_space<vmem>>, vector<1x16x16xbf16>
    %49 = vector.shape_cast %48 : vector<1x16x16xbf16> to vector<16x16xbf16>
    %cst_24 = arith.constant dense<0.000000e+00> : vector<256x16xf32>
    %50 = tpu.matmul %47, %49, %cst_24 {dimension_numbers = #tpu.dot_dimension_numbers<[1], [0], [0], [1], [0, 0, 1, 1], [], []>} : vector<256x16xbf16>, vector<16x16xbf16>, vector<256x16xf32> -> vector<256x16xf32>
    %51 = arith.addf %44, %50 : vector<256x16xf32>
    %52 = vector.extract_strided_slice %1 {offsets = [2, 1, 0], sizes = [16, 16, 16], strides = [1, 1, 1]} : vector<18x18x16xf32> to vector<16x16x16xf32>
    %53 = vector.shape_cast %52 : vector<16x16x16xf32> to vector<256x16xf32>
    %54 = arith.truncf %53 : vector<256x16xf32> to vector<256x16xbf16>
    %c7 = arith.constant 7 : index
    %c0_25 = arith.constant 0 : index
    %c0_26 = arith.constant 0 : index
    %55 = vector.load %arg2[%c7, %c0_25, %c0_26] : memref<9x16x16xbf16, #tpu.memory_space<vmem>>, vector<1x16x16xbf16>
    %56 = vector.shape_cast %55 : vector<1x16x16xbf16> to vector<16x16xbf16>
    %cst_27 = arith.constant dense<0.000000e+00> : vector<256x16xf32>
    %57 = tpu.matmul %54, %56, %cst_27 {dimension_numbers = #tpu.dot_dimension_numbers<[1], [0], [0], [1], [0, 0, 1, 1], [], []>} : vector<256x16xbf16>, vector<16x16xbf16>, vector<256x16xf32> -> vector<256x16xf32>
    %58 = arith.addf %51, %57 : vector<256x16xf32>
    %59 = vector.extract_strided_slice %1 {offsets = [2, 2, 0], sizes = [16, 16, 16], strides = [1, 1, 1]} : vector<18x18x16xf32> to vector<16x16x16xf32>
    %60 = vector.shape_cast %59 : vector<16x16x16xf32> to vector<256x16xf32>
    %61 = arith.truncf %60 : vector<256x16xf32> to vector<256x16xbf16>
    %c8 = arith.constant 8 : index
    %c0_28 = arith.constant 0 : index
    %c0_29 = arith.constant 0 : index
    %62 = vector.load %arg2[%c8, %c0_28, %c0_29] : memref<9x16x16xbf16, #tpu.memory_space<vmem>>, vector<1x16x16xbf16>
    %63 = vector.shape_cast %62 : vector<1x16x16xbf16> to vector<16x16xbf16>
    %cst_30 = arith.constant dense<0.000000e+00> : vector<256x16xf32>
    %64 = tpu.matmul %61, %63, %cst_30 {dimension_numbers = #tpu.dot_dimension_numbers<[1], [0], [0], [1], [0, 0, 1, 1], [], []>} : vector<256x16xbf16>, vector<16x16xbf16>, vector<256x16xf32> -> vector<256x16xf32>
    %65 = arith.addf %58, %64 : vector<256x16xf32>
    %c0_31 = arith.constant 0 : index
    %c0_32 = arith.constant 0 : index
    %66 = vector.load %arg3[%c0_31, %c0_32] : memref<1x16xf32, #tpu.memory_space<vmem>>, vector<1x16xf32>
    %67 = vector.broadcast %66 : vector<1x16xf32> to vector<256x16xf32>
    %68 = arith.addf %65, %67 : vector<256x16xf32>
    %cst_33 = arith.constant 0.000000e+00 : f32
    %69 = vector.broadcast %cst_33 : f32 to vector<256x16xf32>
    %70 = arith.maximumf %68, %69 : vector<256x16xf32>
    %c0_34 = arith.constant 0 : index
    %c0_35 = arith.constant 0 : index
    %71 = vector.load %arg4[%c0_34, %c0_35] : memref<15x16xbf16, #tpu.memory_space<vmem>>, vector<15x16xbf16>
    %72 = arith.truncf %70 : vector<256x16xf32> to vector<256x16xbf16>
    %cst_36 = arith.constant dense<0.000000e+00> : vector<15x256xf32>
    %73 = tpu.matmul %71, %72, %cst_36 {dimension_numbers = #tpu.dot_dimension_numbers<[1], [1], [0], [0], [0, 0, 1, 0], [], []>} : vector<15x16xbf16>, vector<256x16xbf16>, vector<15x256xf32> -> vector<15x256xf32>
    %c0_37 = arith.constant 0 : index
    %c0_38 = arith.constant 0 : index
    %74 = vector.load %arg5[%c0_37, %c0_38] : memref<15x1xf32, #tpu.memory_space<vmem>>, vector<15x1xf32>
    %75 = vector.broadcast %74 : vector<15x1xf32> to vector<15x256xf32>
    %76 = arith.addf %73, %75 : vector<15x256xf32>
    %77 = vector.extract_strided_slice %76 {offsets = [0, 0], sizes = [3, 256], strides = [1, 1]} : vector<15x256xf32> to vector<3x256xf32>
    %cst_39 = arith.constant 0.000000e+00 : f32
    %78 = vector.broadcast %cst_39 : f32 to vector<3x256xf32>
    %79 = arith.subf %78, %77 : vector<3x256xf32>
    %80 = math.exp %79 : vector<3x256xf32>
    %cst_40 = arith.constant 1.000000e+00 : f32
    %81 = vector.broadcast %cst_40 : f32 to vector<3x256xf32>
    %82 = arith.addf %81, %80 : vector<3x256xf32>
    %83 = tpu.reciprocal %82 {approx = true} : vector<3x256xf32> -> vector<3x256xf32>
    %84 = vector.shape_cast %83 : vector<3x256xf32> to vector<1x3x256xf32>
    %c0_41 = arith.constant 0 : index
    %c0_42 = arith.constant 0 : index
    %c0_43 = arith.constant 0 : index
    %85 = vector.load %arg7[%c0_41, %c0_42, %c0_43] : memref<1x3x256xf32, #tpu.memory_space<vmem>>, vector<1x3x256xf32>
    tpu.vector_store %arg7[%c0_41, %c0_42, %c0_43], %84 {strides = array<i32>} : memref<1x3x256xf32, #tpu.memory_space<vmem>>, vector<1x3x256xf32>,
    %86 = vector.extract_strided_slice %76 {offsets = [3, 0], sizes = [4, 256], strides = [1, 1]} : vector<15x256xf32> to vector<4x256xf32>
    %c0_44 = arith.constant 0 : index
    %c0_45 = arith.constant 0 : index
    %87 = vector.load %arg6[%c0_44, %c0_45] : memref<4x768xf32, #tpu.memory_space<vmem>>, vector<4x256xf32>
    %88 = vector.extract_strided_slice %87 {offsets = [2, 0], sizes = [1, 256], strides = [1, 1]} : vector<4x256xf32> to vector<1x256xf32>
    %89 = vector.extract_strided_slice %87 {offsets = [0, 0], sizes = [1, 256], strides = [1, 1]} : vector<4x256xf32> to vector<1x256xf32>
    %90 = arith.subf %88, %89 : vector<1x256xf32>
    %91 = vector.extract_strided_slice %87 {offsets = [3, 0], sizes = [1, 256], strides = [1, 1]} : vector<4x256xf32> to vector<1x256xf32>
    %92 = vector.extract_strided_slice %87 {offsets = [1, 0], sizes = [1, 256], strides = [1, 1]} : vector<4x256xf32> to vector<1x256xf32>
    %93 = arith.subf %91, %92 : vector<1x256xf32>
    %94 = vector.extract_strided_slice %87 {offsets = [0, 0], sizes = [1, 256], strides = [1, 1]} : vector<4x256xf32> to vector<1x256xf32>
    %cst_46 = arith.constant 5.000000e-01 : f32
    %95 = vector.broadcast %cst_46 : f32 to vector<1x256xf32>
    %96 = arith.mulf %95, %90 : vector<1x256xf32>
    %97 = arith.addf %94, %96 : vector<1x256xf32>
    %98 = vector.extract_strided_slice %87 {offsets = [1, 0], sizes = [1, 256], strides = [1, 1]} : vector<4x256xf32> to vector<1x256xf32>
    %cst_47 = arith.constant 5.000000e-01 : f32
    %99 = vector.broadcast %cst_47 : f32 to vector<1x256xf32>
    %100 = arith.mulf %99, %93 : vector<1x256xf32>
    %101 = arith.addf %98, %100 : vector<1x256xf32>
    %102 = vector.extract_strided_slice %86 {offsets = [0, 0], sizes = [1, 256], strides = [1, 1]} : vector<4x256xf32> to vector<1x256xf32>
    %103 = vector.extract_strided_slice %86 {offsets = [1, 0], sizes = [1, 256], strides = [1, 1]} : vector<4x256xf32> to vector<1x256xf32>
    %104 = vector.extract_strided_slice %86 {offsets = [2, 0], sizes = [1, 256], strides = [1, 1]} : vector<4x256xf32> to vector<1x256xf32>
    %cst_48 = arith.constant 4.13516665 : f32
    %105 = vector.broadcast %cst_48 : f32 to vector<1x256xf32>
    %106 = arith.minimumf %104, %105 : vector<1x256xf32>
    %107 = vector.extract_strided_slice %86 {offsets = [3, 0], sizes = [1, 256], strides = [1, 1]} : vector<4x256xf32> to vector<1x256xf32>
    %cst_49 = arith.constant 4.13516665 : f32
    %108 = vector.broadcast %cst_49 : f32 to vector<1x256xf32>
    %109 = arith.minimumf %107, %108 : vector<1x256xf32>
    %110 = arith.mulf %102, %90 : vector<1x256xf32>
    %111 = arith.addf %110, %97 : vector<1x256xf32>
    %112 = arith.mulf %103, %93 : vector<1x256xf32>
    %113 = arith.addf %112, %101 : vector<1x256xf32>
    %114 = math.exp %106 : vector<1x256xf32>
    %115 = arith.mulf %114, %90 : vector<1x256xf32>
    %116 = math.exp %109 : vector<1x256xf32>
    %117 = arith.mulf %116, %93 : vector<1x256xf32>
    %cst_50 = arith.constant 5.000000e-01 : f32
    %118 = vector.broadcast %cst_50 : f32 to vector<1x256xf32>
    %119 = arith.mulf %118, %115 : vector<1x256xf32>
    %120 = arith.subf %111, %119 : vector<1x256xf32>
    %cst_51 = arith.constant 5.000000e-01 : f32
    %121 = vector.broadcast %cst_51 : f32 to vector<1x256xf32>
    %122 = arith.mulf %121, %117 : vector<1x256xf32>
    %123 = arith.subf %113, %122 : vector<1x256xf32>
    %cst_52 = arith.constant 5.000000e-01 : f32
    %124 = vector.broadcast %cst_52 : f32 to vector<1x256xf32>
    %125 = arith.mulf %124, %115 : vector<1x256xf32>
    %126 = arith.addf %111, %125 : vector<1x256xf32>
    %cst_53 = arith.constant 5.000000e-01 : f32
    %127 = vector.broadcast %cst_53 : f32 to vector<1x256xf32>
    %128 = arith.mulf %127, %117 : vector<1x256xf32>
    %129 = arith.addf %113, %128 : vector<1x256xf32>
    %130 = tpu.concatenate %120, %123, %126, %129 in 0 : vector<1x256xf32>, vector<1x256xf32>, vector<1x256xf32>, vector<1x256xf32> -> vector<4x256xf32>
    %131 = vector.shape_cast %130 : vector<4x256xf32> to vector<1x4x256xf32>
    %c0_54 = arith.constant 0 : index
    %c0_55 = arith.constant 0 : index
    %c0_56 = arith.constant 0 : index
    %132 = vector.load %arg8[%c0_54, %c0_55, %c0_56] : memref<1x4x768xf32, #tpu.memory_space<vmem>>, vector<1x4x256xf32>
    tpu.vector_store %arg8[%c0_54, %c0_55, %c0_56], %131 {strides = array<i32>} : memref<1x4x768xf32, #tpu.memory_space<vmem>>, vector<1x4x256xf32>,
    %133 = vector.extract_strided_slice %76 {offsets = [7, 0], sizes = [4, 256], strides = [1, 1]} : vector<15x256xf32> to vector<4x256xf32>
    %c0_57 = arith.constant 0 : index
    %c256 = arith.constant 256 : index
    %134 = vector.load %arg6[%c0_57, %c256] : memref<4x768xf32, #tpu.memory_space<vmem>>, vector<4x256xf32>
    %135 = vector.extract_strided_slice %134 {offsets = [2, 0], sizes = [1, 256], strides = [1, 1]} : vector<4x256xf32> to vector<1x256xf32>
    %136 = vector.extract_strided_slice %134 {offsets = [0, 0], sizes = [1, 256], strides = [1, 1]} : vector<4x256xf32> to vector<1x256xf32>
    %137 = arith.subf %135, %136 : vector<1x256xf32>
    %138 = vector.extract_strided_slice %134 {offsets = [3, 0], sizes = [1, 256], strides = [1, 1]} : vector<4x256xf32> to vector<1x256xf32>
    %139 = vector.extract_strided_slice %134 {offsets = [1, 0], sizes = [1, 256], strides = [1, 1]} : vector<4x256xf32> to vector<1x256xf32>
    %140 = arith.subf %138, %139 : vector<1x256xf32>
    %141 = vector.extract_strided_slice %134 {offsets = [0, 0], sizes = [1, 256], strides = [1, 1]} : vector<4x256xf32> to vector<1x256xf32>
    %cst_58 = arith.constant 5.000000e-01 : f32
    %142 = vector.broadcast %cst_58 : f32 to vector<1x256xf32>
    %143 = arith.mulf %142, %137 : vector<1x256xf32>
    %144 = arith.addf %141, %143 : vector<1x256xf32>
    %145 = vector.extract_strided_slice %134 {offsets = [1, 0], sizes = [1, 256], strides = [1, 1]} : vector<4x256xf32> to vector<1x256xf32>
    %cst_59 = arith.constant 5.000000e-01 : f32
    %146 = vector.broadcast %cst_59 : f32 to vector<1x256xf32>
    %147 = arith.mulf %146, %140 : vector<1x256xf32>
    %148 = arith.addf %145, %147 : vector<1x256xf32>
    %149 = vector.extract_strided_slice %133 {offsets = [0, 0], sizes = [1, 256], strides = [1, 1]} : vector<4x256xf32> to vector<1x256xf32>
    %150 = vector.extract_strided_slice %133 {offsets = [1, 0], sizes = [1, 256], strides = [1, 1]} : vector<4x256xf32> to vector<1x256xf32>
    %151 = vector.extract_strided_slice %133 {offsets = [2, 0], sizes = [1, 256], strides = [1, 1]} : vector<4x256xf32> to vector<1x256xf32>
    %cst_60 = arith.constant 4.13516665 : f32
    %152 = vector.broadcast %cst_60 : f32 to vector<1x256xf32>
    %153 = arith.minimumf %151, %152 : vector<1x256xf32>
    %154 = vector.extract_strided_slice %133 {offsets = [3, 0], sizes = [1, 256], strides = [1, 1]} : vector<4x256xf32> to vector<1x256xf32>
    %cst_61 = arith.constant 4.13516665 : f32
    %155 = vector.broadcast %cst_61 : f32 to vector<1x256xf32>
    %156 = arith.minimumf %154, %155 : vector<1x256xf32>
    %157 = arith.mulf %149, %137 : vector<1x256xf32>
    %158 = arith.addf %157, %144 : vector<1x256xf32>
    %159 = arith.mulf %150, %140 : vector<1x256xf32>
    %160 = arith.addf %159, %148 : vector<1x256xf32>
    %161 = math.exp %153 : vector<1x256xf32>
    %162 = arith.mulf %161, %137 : vector<1x256xf32>
    %163 = math.exp %156 : vector<1x256xf32>
    %164 = arith.mulf %163, %140 : vector<1x256xf32>
    %cst_62 = arith.constant 5.000000e-01 : f32
    %165 = vector.broadcast %cst_62 : f32 to vector<1x256xf32>
    %166 = arith.mulf %165, %162 : vector<1x256xf32>
    %167 = arith.subf %158, %166 : vector<1x256xf32>
    %cst_63 = arith.constant 5.000000e-01 : f32
    %168 = vector.broadcast %cst_63 : f32 to vector<1x256xf32>
    %169 = arith.mulf %168, %164 : vector<1x256xf32>
    %170 = arith.subf %160, %169 : vector<1x256xf32>
    %cst_64 = arith.constant 5.000000e-01 : f32
    %171 = vector.broadcast %cst_64 : f32 to vector<1x256xf32>
    %172 = arith.mulf %171, %162 : vector<1x256xf32>
    %173 = arith.addf %158, %172 : vector<1x256xf32>
    %cst_65 = arith.constant 5.000000e-01 : f32
    %174 = vector.broadcast %cst_65 : f32 to vector<1x256xf32>
    %175 = arith.mulf %174, %164 : vector<1x256xf32>
    %176 = arith.addf %160, %175 : vector<1x256xf32>
    %177 = tpu.concatenate %167, %170, %173, %176 in 0 : vector<1x256xf32>, vector<1x256xf32>, vector<1x256xf32>, vector<1x256xf32> -> vector<4x256xf32>
    %178 = vector.shape_cast %177 : vector<4x256xf32> to vector<1x4x256xf32>
    %c0_66 = arith.constant 0 : index
    %c0_67 = arith.constant 0 : index
    %c256_68 = arith.constant 256 : index
    %179 = vector.load %arg8[%c0_66, %c0_67, %c256_68] : memref<1x4x768xf32, #tpu.memory_space<vmem>>, vector<1x4x256xf32>
    tpu.vector_store %arg8[%c0_66, %c0_67, %c256_68], %178 {strides = array<i32>} : memref<1x4x768xf32, #tpu.memory_space<vmem>>, vector<1x4x256xf32>,
    %180 = vector.extract_strided_slice %76 {offsets = [11, 0], sizes = [4, 256], strides = [1, 1]} : vector<15x256xf32> to vector<4x256xf32>
    %c0_69 = arith.constant 0 : index
    %c512 = arith.constant 512 : index
    %181 = vector.load %arg6[%c0_69, %c512] : memref<4x768xf32, #tpu.memory_space<vmem>>, vector<4x256xf32>
    %182 = vector.extract_strided_slice %181 {offsets = [2, 0], sizes = [1, 256], strides = [1, 1]} : vector<4x256xf32> to vector<1x256xf32>
    %183 = vector.extract_strided_slice %181 {offsets = [0, 0], sizes = [1, 256], strides = [1, 1]} : vector<4x256xf32> to vector<1x256xf32>
    %184 = arith.subf %182, %183 : vector<1x256xf32>
    %185 = vector.extract_strided_slice %181 {offsets = [3, 0], sizes = [1, 256], strides = [1, 1]} : vector<4x256xf32> to vector<1x256xf32>
    %186 = vector.extract_strided_slice %181 {offsets = [1, 0], sizes = [1, 256], strides = [1, 1]} : vector<4x256xf32> to vector<1x256xf32>
    %187 = arith.subf %185, %186 : vector<1x256xf32>
    %188 = vector.extract_strided_slice %181 {offsets = [0, 0], sizes = [1, 256], strides = [1, 1]} : vector<4x256xf32> to vector<1x256xf32>
    %cst_70 = arith.constant 5.000000e-01 : f32
    %189 = vector.broadcast %cst_70 : f32 to vector<1x256xf32>
    %190 = arith.mulf %189, %184 : vector<1x256xf32>
    %191 = arith.addf %188, %190 : vector<1x256xf32>
    %192 = vector.extract_strided_slice %181 {offsets = [1, 0], sizes = [1, 256], strides = [1, 1]} : vector<4x256xf32> to vector<1x256xf32>
    %cst_71 = arith.constant 5.000000e-01 : f32
    %193 = vector.broadcast %cst_71 : f32 to vector<1x256xf32>
    %194 = arith.mulf %193, %187 : vector<1x256xf32>
    %195 = arith.addf %192, %194 : vector<1x256xf32>
    %196 = vector.extract_strided_slice %180 {offsets = [0, 0], sizes = [1, 256], strides = [1, 1]} : vector<4x256xf32> to vector<1x256xf32>
    %197 = vector.extract_strided_slice %180 {offsets = [1, 0], sizes = [1, 256], strides = [1, 1]} : vector<4x256xf32> to vector<1x256xf32>
    %198 = vector.extract_strided_slice %180 {offsets = [2, 0], sizes = [1, 256], strides = [1, 1]} : vector<4x256xf32> to vector<1x256xf32>
    %cst_72 = arith.constant 4.13516665 : f32
    %199 = vector.broadcast %cst_72 : f32 to vector<1x256xf32>
    %200 = arith.minimumf %198, %199 : vector<1x256xf32>
    %201 = vector.extract_strided_slice %180 {offsets = [3, 0], sizes = [1, 256], strides = [1, 1]} : vector<4x256xf32> to vector<1x256xf32>
    %cst_73 = arith.constant 4.13516665 : f32
    %202 = vector.broadcast %cst_73 : f32 to vector<1x256xf32>
    %203 = arith.minimumf %201, %202 : vector<1x256xf32>
    %204 = arith.mulf %196, %184 : vector<1x256xf32>
    %205 = arith.addf %204, %191 : vector<1x256xf32>
    %206 = arith.mulf %197, %187 : vector<1x256xf32>
    %207 = arith.addf %206, %195 : vector<1x256xf32>
    %208 = math.exp %200 : vector<1x256xf32>
    %209 = arith.mulf %208, %184 : vector<1x256xf32>
    %210 = math.exp %203 : vector<1x256xf32>
    %211 = arith.mulf %210, %187 : vector<1x256xf32>
    %cst_74 = arith.constant 5.000000e-01 : f32
    %212 = vector.broadcast %cst_74 : f32 to vector<1x256xf32>
    %213 = arith.mulf %212, %209 : vector<1x256xf32>
    %214 = arith.subf %205, %213 : vector<1x256xf32>
    %cst_75 = arith.constant 5.000000e-01 : f32
    %215 = vector.broadcast %cst_75 : f32 to vector<1x256xf32>
    %216 = arith.mulf %215, %211 : vector<1x256xf32>
    %217 = arith.subf %207, %216 : vector<1x256xf32>
    %cst_76 = arith.constant 5.000000e-01 : f32
    %218 = vector.broadcast %cst_76 : f32 to vector<1x256xf32>
    %219 = arith.mulf %218, %209 : vector<1x256xf32>
    %220 = arith.addf %205, %219 : vector<1x256xf32>
    %cst_77 = arith.constant 5.000000e-01 : f32
    %221 = vector.broadcast %cst_77 : f32 to vector<1x256xf32>
    %222 = arith.mulf %221, %211 : vector<1x256xf32>
    %223 = arith.addf %207, %222 : vector<1x256xf32>
    %224 = tpu.concatenate %214, %217, %220, %223 in 0 : vector<1x256xf32>, vector<1x256xf32>, vector<1x256xf32>, vector<1x256xf32> -> vector<4x256xf32>
    %225 = vector.shape_cast %224 : vector<4x256xf32> to vector<1x4x256xf32>
    %c0_78 = arith.constant 0 : index
    %c0_79 = arith.constant 0 : index
    %c512_80 = arith.constant 512 : index
    %226 = vector.load %arg8[%c0_78, %c0_79, %c512_80] : memref<1x4x768xf32, #tpu.memory_space<vmem>>, vector<1x4x256xf32>
    tpu.vector_store %arg8[%c0_78, %c0_79, %c512_80], %225 {strides = array<i32>} : memref<1x4x768xf32, #tpu.memory_space<vmem>>, vector<1x4x256xf32>,
    return
  }
  func.func @transform_0(%arg0: i32) -> (i32, i32, i32, i32) {
    %c0_i32 = arith.constant 0 : i32
    %c0_i32_0 = arith.constant 0 : i32
    %c0_i32_1 = arith.constant 0 : i32
    %c0_i32_2 = arith.constant 0 : i32
    return %arg0, %c0_i32, %c0_i32_0, %c0_i32_1 : i32, i32, i32, i32
  }
  func.func @transform_1(%arg0: i32) -> (i32, i32, i32) {
    %c0_i32 = arith.constant 0 : i32
    %c0_i32_0 = arith.constant 0 : i32
    %c0_i32_1 = arith.constant 0 : i32
    %c0_i32_2 = arith.constant 0 : i32
    return %c0_i32, %c0_i32_0, %c0_i32_1 : i32, i32, i32
  }
  func.func @transform_2(%arg0: i32) -> (i32, i32) {
    %c0_i32 = arith.constant 0 : i32
    %c0_i32_0 = arith.constant 0 : i32
    %c0_i32_1 = arith.constant 0 : i32
    return %c0_i32, %c0_i32_0 : i32, i32
  }
  func.func @transform_3(%arg0: i32) -> (i32, i32) {
    %c0_i32 = arith.constant 0 : i32
    %c0_i32_0 = arith.constant 0 : i32
    %c0_i32_1 = arith.constant 0 : i32
    return %c0_i32, %c0_i32_0 : i32, i32
  }
  func.func @transform_4(%arg0: i32) -> (i32, i32) {
    %c0_i32 = arith.constant 0 : i32
    %c0_i32_0 = arith.constant 0 : i32
    %c0_i32_1 = arith.constant 0 : i32
    return %c0_i32, %c0_i32_0 : i32, i32
  }
  func.func @transform_5(%arg0: i32) -> (i32, i32) {
    %c0_i32 = arith.constant 0 : i32
    %c0_i32_0 = arith.constant 0 : i32
    %c0_i32_1 = arith.constant 0 : i32
    return %c0_i32, %c0_i32_0 : i32, i32
  }
  func.func @transform_6(%arg0: i32) -> (i32, i32, i32) {
    %c0_i32 = arith.constant 0 : i32
    %c0_i32_0 = arith.constant 0 : i32
    %c0_i32_1 = arith.constant 0 : i32
    return %arg0, %c0_i32, %c0_i32_0 : i32, i32, i32
  }
  func.func @transform_7(%arg0: i32) -> (i32, i32, i32) {
    %c0_i32 = arith.constant 0 : i32
    %c0_i32_0 = arith.constant 0 : i32
    %c0_i32_1 = arith.constant 0 : i32
    return %arg0, %c0_i32, %c0_i32_0 : i32, i32, i32
  }
}

</mosaic_0001>

<llo_original>
// kernel: rpn_forward.1
$region0: #{rpn_forward.1}
  #allocation0 [shape = 'u32[]', space=smem, size = 0x4, offset = 0x4, fixed_abs, tag = 'smem constant byte address 0x4 - core index']
  #allocation1 [shape = 'u32[72,128]{1,0:T(1,128)}', space=vmem, size = 0x9000, scoped, tag = 'internal scratch']
  %s0 = inlined_call_operand.vmem [shape: f32[2,18,18,16], index: 0, kind: input, shape index: {}]
  %s1 = inlined_call_operand.vmem [shape: bf16[9,16,16], index: 1, kind: input, shape index: {}]
  %s2 = inlined_call_operand.hbm [shape: f32[1,16], index: 2, kind: input, shape index: {}]
  %s3 = inlined_call_operand.vmem [shape: bf16[15,16], index: 3, kind: input, shape index: {}]
  %s4 = inlined_call_operand.vmem [shape: f32[15,1], index: 4, kind: input, shape index: {}]
  %s5 = inlined_call_operand.vmem [shape: f32[4,768], index: 5, kind: input, shape index: {}]
  %s6 = inlined_call_operand.vmem [shape: f32[2,3,256], index: 6, kind: output, shape index: {0}]
  %s7 = inlined_call_operand.vmem [shape: f32[2,4,768], index: 7, kind: output, shape index: {1}]
  %8 = xla_tuple %s6, %s7
  %s9 = sld [smem:[#allocation0]]
  $region69: #{rpn_forward.1} parent=0
    _
  %s11 = ssub.s32 1, %s9
  %s12 = scalar_select 0, %s11, %s9
  $region1: #{rpn_forward.1} parent=0
    #allocation2 [shape = 'u8[512]{0}', space=vmem, size = 0x400, scoped, tag = 'input window, operand 2, single buffered']
    #allocation3 [shape = 's32[2]{0}', space=sflag, size = 0x8, scoped, tag = 'scoped memory for rpn_forward.1']
    %13 = vsyncpa [#allocation3], 0
    loop: start=0, step=1, limit=4
    $region2: #{rpn_forward.1} parent=1 // loop_pre_header
      _
    $region3: #{rpn_forward.1} parent=1 // loop_header
      %s15 = sphi 0, %s19
      %p16 = scmp.ge.s32.totalorder %s15, 4
      %s25 = sphi 0, %s27
      %s28 = sphi 0, %s25
      %s29 = sphi 0, %s28
      %s45 = sphi 0, %s29
      %s49 = sphi 0, %s49
      %s51 = sphi 0, %s49
      %s52 = sphi 0, %s51
      %s66 = sphi 0, %s52
      %s70 = sphi 0, %s70
      %s72 = sphi 0, %s70
      %s73 = sphi 0, %s72
      %s87 = sphi 0, %s73
      %s91 = sphi 0, %s91
      %s93 = sphi 0, %s91
      %s94 = sphi 0, %s93
      %s108 = sphi 0, %s94
      %s112 = sphi 0, %s112
      %s114 = sphi 0, %s112
      %s115 = sphi 0, %s114
      %s129 = sphi 0, %s115
      %s133 = sphi 0, %s133
      %s135 = sphi 0, %s133
      %s136 = sphi 0, %s135
      %s150 = sphi 0, %s136
      %s156 = sphi 0, %s158
      %s159 = sphi 0, %s156
      %s160 = sphi 0, %s159
      %s176 = sphi 0, %s160
      %s182 = sphi 0, %s184
      %s185 = sphi 0, %s182
      %s186 = sphi 0, %s185
      %s202 = sphi 0, %s186
    $region4: #{rpn_forward.1} parent=1 // loop_header_branch
      %18 = sbr.rel (%p16) target = $region8
    $region5: #{rpn_forward.1} parent=1 // loop_body
      %s20 = ssub.s32 %s15, 1
      %s21 = ssub.s32 %s15, 2
      %s22 = sadd.s32 %s15, 1
      %s23 = ssub.s32 %s15, %s22
      %p24 = scmp.eq.s32.totalorder %s23, 0
      %s26 = sadd.s32 %s25, 1
      %s27 = scalar_select %p24, %s25, %s26
      %p30 = pneg %p24
      %p31 = scmp.eq.s32.totalorder %s15, 1
      %p32 = por %p30, %p31
      %p33 = scmp.ne.s32.totalorder %s25, %s28
      %p34 = scmp.eq.s32.totalorder %s15, 0
      %p35 = por %p33, %p34
      %p36 = scmp.ne.s32.totalorder %s25, %s28
      %p37 = scmp.eq.s32.totalorder %s20, 1
      %p38 = por %p36, %p37
      %p39 = scmp.ne.s32.totalorder %s28, %s29
      %p40 = scmp.eq.s32.totalorder %s20, 0
      %p41 = por %p39, %p40
      %p42 = scmp.ne.s32.totalorder %s28, %s29
      %p43 = scmp.eq.s32.totalorder %s21, 1
      %p44 = por %p42, %p43
      %p46 = scmp.ne.s32.totalorder %s29, %s45
      %p47 = scmp.eq.s32.totalorder %s21, 0
      %p48 = por %p46, %p47
      %s50 = sadd.s32 %s49, 1
      %p53 = scmp.eq.s32.totalorder %s15, 1
      %p54 = scmp.ne.s32.totalorder %s49, %s51
      %p55 = scmp.eq.s32.totalorder %s15, 0
      %p56 = por %p54, %p55
      %p57 = scmp.ne.s32.totalorder %s49, %s51
      %p58 = scmp.eq.s32.totalorder %s20, 1
      %p59 = por %p57, %p58
      %p60 = scmp.ne.s32.totalorder %s51, %s52
      %p61 = scmp.eq.s32.totalorder %s20, 0
      %p62 = por %p60, %p61
      %p63 = scmp.ne.s32.totalorder %s51, %s52
      %p64 = scmp.eq.s32.totalorder %s21, 1
      %p65 = por %p63, %p64
      %p67 = scmp.ne.s32.totalorder %s52, %s66
      %p68 = scmp.eq.s32.totalorder %s21, 0
      %p69 = por %p67, %p68
      %s71 = sadd.s32 %s70, 1
      %p74 = scmp.eq.s32.totalorder %s15, 1
      %p75 = scmp.ne.s32.totalorder %s70, %s72
      %p76 = scmp.eq.s32.totalorder %s15, 0
      %p77 = por %p75, %p76
      %p78 = scmp.ne.s32.totalorder %s70, %s72
      %p79 = scmp.eq.s32.totalorder %s20, 1
      %p80 = por %p78, %p79
      %p81 = scmp.ne.s32.totalorder %s72, %s73
      %p82 = scmp.eq.s32.totalorder %s20, 0
      %p83 = por %p81, %p82
      %p84 = scmp.ne.s32.totalorder %s72, %s73
      %p85 = scmp.eq.s32.totalorder %s21, 1
      %p86 = por %p84, %p85
      %p88 = scmp.ne.s32.totalorder %s73, %s87
      %p89 = scmp.eq.s32.totalorder %s21, 0
      %p90 = por %p88, %p89
      %s92 = sadd.s32 %s91, 1
      %p95 = scmp.eq.s32.totalorder %s15, 1
      %p96 = scmp.ne.s32.totalorder %s91, %s93
      %p97 = scmp.eq.s32.totalorder %s15, 0
      %p98 = por %p96, %p97
      %p99 = scmp.ne.s32.totalorder %s91, %s93
      %p100 = scmp.eq.s32.totalorder %s20, 1
      %p101 = por %p99, %p100
      %p102 = scmp.ne.s32.totalorder %s93, %s94
      %p103 = scmp.eq.s32.totalorder %s20, 0
      %p104 = por %p102, %p103
      %p105 = scmp.ne.s32.totalorder %s93, %s94
      %p106 = scmp.eq.s32.totalorder %s21, 1
      %p107 = por %p105, %p106
      %p109 = scmp.ne.s32.totalorder %s94, %s108
      %p110 = scmp.eq.s32.totalorder %s21, 0
      %p111 = por %p109, %p110
      %s113 = sadd.s32 %s112, 1
      %p116 = scmp.eq.s32.totalorder %s15, 1
      %p117 = scmp.ne.s32.totalorder %s112, %s114
      %p118 = scmp.eq.s32.totalorder %s15, 0
      %p119 = por %p117, %p118
      %p120 = scmp.ne.s32.totalorder %s112, %s114
      %p121 = scmp.eq.s32.totalorder %s20, 1
      %p122 = por %p120, %p121
      %p123 = scmp.ne.s32.totalorder %s114, %s115
      %p124 = scmp.eq.s32.totalorder %s20, 0
      %p125 = por %p123, %p124
      %p126 = scmp.ne.s32.totalorder %s114, %s115
      %p127 = scmp.eq.s32.totalorder %s21, 1
      %p128 = por %p126, %p127
      %p130 = scmp.ne.s32.totalorder %s115, %s129
      %p131 = scmp.eq.s32.totalorder %s21, 0
      %p132 = por %p130, %p131
      %s134 = sadd.s32 %s133, 1
      %p137 = scmp.eq.s32.totalorder %s15, 1
      %p138 = scmp.ne.s32.totalorder %s133, %s135
      %p139 = scmp.eq.s32.totalorder %s15, 0
      %p140 = por %p138, %p139
      %p141 = scmp.ne.s32.totalorder %s133, %s135
      %p142 = scmp.eq.s32.totalorder %s20, 1
      %p143 = por %p141, %p142
      %p144 = scmp.ne.s32.totalorder %s135, %s136
      %p145 = scmp.eq.s32.totalorder %s20, 0
      %p146 = por %p144, %p145
      %p147 = scmp.ne.s32.totalorder %s135, %s136
      %p148 = scmp.eq.s32.totalorder %s21, 1
      %p149 = por %p147, %p148
      %p151 = scmp.ne.s32.totalorder %s136, %s150
      %p152 = scmp.eq.s32.totalorder %s21, 0
      %p153 = por %p151, %p152
      %s154 = ssub.s32 %s15, %s22
      %p155 = scmp.eq.s32.totalorder %s154, 0
      %s157 = sadd.s32 %s156, 1
      %s158 = scalar_select %p155, %s156, %s157
      %p161 = pneg %p155
      %p162 = scmp.eq.s32.totalorder %s15, 1
      %p163 = por %p161, %p162
      %p164 = scmp.ne.s32.totalorder %s156, %s159
      %p165 = scmp.eq.s32.totalorder %s15, 0
      %p166 = por %p164, %p165
      %p167 = scmp.ne.s32.totalorder %s156, %s159
      %p168 = scmp.eq.s32.totalorder %s20, 1
      %p169 = por %p167, %p168
      %p170 = scmp.ne.s32.totalorder %s159, %s160
      %p171 = scmp.eq.s32.totalorder %s20, 0
      %p172 = por %p170, %p171
      %p173 = scmp.ne.s32.totalorder %s159, %s160
      %p174 = scmp.eq.s32.totalorder %s21, 1
      %p175 = por %p173, %p174
      %p177 = scmp.ne.s32.totalorder %s160, %s176
      %p178 = scmp.eq.s32.totalorder %s21, 0
      %p179 = por %p177, %p178
      %s180 = ssub.s32 %s15, %s22
      %p181 = scmp.eq.s32.totalorder %s180, 0
      %s183 = sadd.s32 %s182, 1
      %s184 = scalar_select %p181, %s182, %s183
      %p187 = pneg %p181
      %p188 = scmp.eq.s32.totalorder %s15, 1
      %p189 = por %p187, %p188
      %p190 = scmp.ne.s32.totalorder %s182, %s185
      %p191 = scmp.eq.s32.totalorder %s15, 0
      %p192 = por %p190, %p191
      %p193 = scmp.ne.s32.totalorder %s182, %s185
      %p194 = scmp.eq.s32.totalorder %s20, 1
      %p195 = por %p193, %p194
      %p196 = scmp.ne.s32.totalorder %s185, %s186
      %p197 = scmp.eq.s32.totalorder %s20, 0
      %p198 = por %p196, %p197
      %p199 = scmp.ne.s32.totalorder %s185, %s186
      %p200 = scmp.eq.s32.totalorder %s21, 1
      %p201 = por %p199, %p200
      %p203 = scmp.ne.s32.totalorder %s186, %s202
      %p204 = scmp.eq.s32.totalorder %s21, 0
      %p205 = por %p203, %p204
      %p206 = scmp.le.s32.totalorder 1, %s15
      %p207 = scmp.lt.s32.totalorder %s15, 3
      %p208 = pnand %p206, %p207
      %p209 = pneg %p208
      // Predicated region
      $region9: #{rpn_forward.1} parent=5 // pred_check
        _
      $region10: #{rpn_forward.1} parent=5 // pred_check_branch
        %211 = sbr.rel (%p208) target = $region12
      $region11: #{rpn_forward.1} parent=5 // pred_region
        %s212 = ssub.s32 %s15, 1
        // Predicated region
        $region13: #{rpn_forward.1} parent=11 // pred_check
          %p213 = pneg %p62
        $region14: #{rpn_forward.1} parent=11 // pred_check_branch
          %215 = sbr.rel (%p213) target = $region16
        $region15: #{rpn_forward.1} parent=11 // pred_region
          _
        $region16: #{rpn_forward.1} parent=11 // pred_fallthru
          _
        // Predicated region
        $region17: #{rpn_forward.1} parent=11 // pred_check
          %p216 = pneg %p83
        $region18: #{rpn_forward.1} parent=11 // pred_check_branch
          %218 = sbr.rel (%p216) target = $region20
        $region19: #{rpn_forward.1} parent=11 // pred_region
          %220 = vsyncadd [#allocation3], 0
          %s222 = sshll.u32 %s2, 4
          %s223 = int_to_ptr.hbm [resolvable:$true] %s222
          %s224 = sshll.u32 [#allocation2], 4
          %s225 = int_to_ptr.vmem [resolvable:$true] %s224
          %227 = dma.hbm_to_vmem [thread:$0]  %s223, 16, %s225, [#allocation3]
        $region20: #{rpn_forward.1} parent=11 // pred_fallthru
          _
        // Predicated region
        $region21: #{rpn_forward.1} parent=11 // pred_check
          %p228 = pneg %p104
        $region22: #{rpn_forward.1} parent=11 // pred_check_branch
          %230 = sbr.rel (%p228) target = $region24
        $region23: #{rpn_forward.1} parent=11 // pred_region
          _
        $region24: #{rpn_forward.1} parent=11 // pred_fallthru
          _
        // Predicated region
        $region25: #{rpn_forward.1} parent=11 // pred_check
          %p231 = pneg %p125
        $region26: #{rpn_forward.1} parent=11 // pred_check_branch
          %233 = sbr.rel (%p231) target = $region28
        $region27: #{rpn_forward.1} parent=11 // pred_region
          _
        $region28: #{rpn_forward.1} parent=11 // pred_fallthru
          _
        // Predicated region
        $region29: #{rpn_forward.1} parent=11 // pred_check
          %p234 = pneg %p146
        $region30: #{rpn_forward.1} parent=11 // pred_check_branch
          %236 = sbr.rel (%p234) target = $region32
        $region31: #{rpn_forward.1} parent=11 // pred_region
          _
        $region32: #{rpn_forward.1} parent=11 // pred_fallthru
          _
      $region12: #{rpn_forward.1} parent=5 // pred_fallthru
        _
      %p237 = scmp.lt.s32.totalorder %s15, 2
      // Predicated region
      $region33: #{rpn_forward.1} parent=5 // pred_check
        %p238 = pneg %p237
      $region34: #{rpn_forward.1} parent=5 // pred_check_branch
        %240 = sbr.rel (%p238) target = $region36
      $region35: #{rpn_forward.1} parent=5 // pred_region
        // Predicated region
        $region37: #{rpn_forward.1} parent=35 // pred_check
          %p241 = pneg %p35
        $region38: #{rpn_forward.1} parent=35 // pred_check_branch
          %243 = sbr.rel (%p241) target = $region40
        $region39: #{rpn_forward.1} parent=35 // pred_region
          %p244 = scmp.lt.s32.totalorder %s15, 1
          %s245 = scalar_select %p244, %s15, 1
          %s246 = smul.addr %s245, 54
          %s247 = smul.addr %s246, 8
          %s248 = scalar_lea.vmem %s0, %s247
        $region40: #{rpn_forward.1} parent=35 // pred_fallthru
          _
      $region36: #{rpn_forward.1} parent=5 // pred_fallthru
        _
      %p249 = scmp.le.s32.totalorder 1, %s15
      %p250 = scmp.lt.s32.totalorder %s15, 3
      %p251 = pnand %p249, %p250
      %p252 = pneg %p251
      // Predicated region
      $region41: #{rpn_forward.1} parent=5 // pred_check
        _
      $region42: #{rpn_forward.1} parent=5 // pred_check_branch
        %254 = sbr.rel (%p251) target = $region44
      $region43: #{rpn_forward.1} parent=5 // pred_region
        %s255 = ssub.s32 %s15, 1
        // Predicated region
        $region45: #{rpn_forward.1} parent=43 // pred_check
          %p256 = pneg %p83
        $region46: #{rpn_forward.1} parent=43 // pred_check_branch
          %258 = sbr.rel (%p256) target = $region48
        $region47: #{rpn_forward.1} parent=43 // pred_region
          %260 = dma.done [#allocation3], 16
        $region48: #{rpn_forward.1} parent=43 // pred_fallthru
          _
        %p261 = scmp.lt.s32.totalorder %s20, 1
        %s262 = scalar_select %p261, %s20, 1
        %s263 = smul.addr %s262, 54
        %s264 = smul.addr %s263, 8
        %s265 = scalar_lea.vmem %s0, %s264
        %p266 = pneg %p41
        %p267 = pneg %p38
        %p268 = pneg %p62
        %p269 = pneg %p59
        %p270 = pneg %p83
        %p271 = pneg %p80
        %p272 = pneg %p104
        %p273 = pneg %p101
        %p274 = pneg %p125
        %p275 = pneg %p122
        %p276 = pneg %p146
        %p277 = pneg %p143
        %p278 = pneg %p172
        %p279 = pneg %p169
        %p280 = scmp.lt.s32.totalorder %s20, 1
        %s281 = scalar_select %p280, %s20, 1
        %s282 = smul.addr %s281, 2
        %s283 = smul.addr %s282, 4
        %s284 = scalar_lea.vmem %s6, %s283
        %p285 = pneg %p198
        %p286 = pneg %p195
        %p287 = scmp.lt.s32.totalorder %s20, 1
        %s288 = scalar_select %p287, %s20, 1
        %s289 = smul.addr %s288, 6
        %s290 = smul.addr %s289, 4
        %s291 = scalar_lea.vmem %s7, %s290
        %p292 = scmp.lt.s32.totalorder %s20, 1
        %s293 = scalar_select %p292, %s20, 1
        %s294 = smul.addr %s293, 54
        %s295 = smul.addr %s294, 8
        %s296 = scalar_lea.vmem %s0, %s295
        %p297 = scmp.lt.s32.totalorder %s20, 1
        %s298 = scalar_select %p297, %s20, 1
        %s299 = smul.addr %s298, 2
        %s300 = smul.addr %s299, 4
        %s301 = scalar_lea.vmem %s6, %s300
        %p302 = scmp.lt.s32.totalorder %s20, 1
        %s303 = scalar_select %p302, %s20, 1
        %s304 = smul.addr %s303, 6
        %s305 = smul.addr %s304, 4
        %s306 = scalar_lea.vmem %s7, %s305
        %v308 = vld [vmem:[%s296] sm:$0xff]
        %v309 = vld [vmem:[%s296 + $0x8] sm:$0xff]
        %v310 = vld [vmem:[%s296 + $0x10] sm:$0x3]
        %v311 = vld [vmem:[%s296 + $0x18] sm:$0xff]
        %v312 = vld [vmem:[%s296 + $0x20] sm:$0xff]
        %v313 = vld [vmem:[%s296 + $0x28] sm:$0x3]
        %v314 = vld [vmem:[%s296 + $0x30] sm:$0xff]
        %v315 = vld [vmem:[%s296 + $0x38] sm:$0xff]
        %v316 = vld [vmem:[%s296 + $0x40] sm:$0x3]
        %v317 = vld [vmem:[%s296 + $0x48] sm:$0xff]
        %v318 = vld [vmem:[%s296 + $0x50] sm:$0xff]
        %v319 = vld [vmem:[%s296 + $0x58] sm:$0x3]
        %v320 = vld [vmem:[%s296 + $0x60] sm:$0xff]
        %v321 = vld [vmem:[%s296 + $0x68] sm:$0xff]
        %v322 = vld [vmem:[%s296 + $0x70] sm:$0x3]
        %v323 = vld [vmem:[%s296 + $0x78] sm:$0xff]
        %v324 = vld [vmem:[%s296 + $0x80] sm:$0xff]
        %v325 = vld [vmem:[%s296 + $0x88] sm:$0x3]
        %v326 = vld [vmem:[%s296 + $0x90] sm:$0xff]
        %v327 = vld [vmem:[%s296 + $0x98] sm:$0xff]
        %v328 = vld [vmem:[%s296 + $0xa0] sm:$0x3]
        %v329 = vld [vmem:[%s296 + $0xa8] sm:$0xff]
        %v330 = vld [vmem:[%s296 + $0xb0] sm:$0xff]
        %v331 = vld [vmem:[%s296 + $0xb8] sm:$0x3]
        %v332 = vld [vmem:[%s296 + $0xc0] sm:$0xff]
        %v333 = vld [vmem:[%s296 + $0xc8] sm:$0xff]
        %v334 = vld [vmem:[%s296 + $0xd0] sm:$0x3]
        %v335 = vld [vmem:[%s296 + $0xd8] sm:$0xff]
        %v336 = vld [vmem:[%s296 + $0xe0] sm:$0xff]
        %v337 = vld [vmem:[%s296 + $0xe8] sm:$0x3]
        %v338 = vld [vmem:[%s296 + $0xf0] sm:$0xff]
        %v339 = vld [vmem:[%s296 + $0xf8] sm:$0xff]
        %v340 = vld [vmem:[%s296 + $0x100] sm:$0x3]
        %v341 = vld [vmem:[%s296 + $0x108] sm:$0xff]
        %v342 = vld [vmem:[%s296 + $0x110] sm:$0xff]
        %v343 = vld [vmem:[%s296 + $0x118] sm:$0x3]
        %v344 = vld [vmem:[%s296 + $0x120] sm:$0xff]
        %v345 = vld [vmem:[%s296 + $0x128] sm:$0xff]
        %v346 = vld [vmem:[%s296 + $0x130] sm:$0x3]
        %v347 = vld [vmem:[%s296 + $0x138] sm:$0xff]
        %v348 = vld [vmem:[%s296 + $0x140] sm:$0xff]
        %v349 = vld [vmem:[%s296 + $0x148] sm:$0x3]
        %v350 = vld [vmem:[%s296 + $0x150] sm:$0xff]
        %v351 = vld [vmem:[%s296 + $0x158] sm:$0xff]
        %v352 = vld [vmem:[%s296 + $0x160] sm:$0x3]
        %v353 = vld [vmem:[%s296 + $0x168] sm:$0xff]
        %v354 = vld [vmem:[%s296 + $0x170] sm:$0xff]
        %v355 = vld [vmem:[%s296 + $0x178] sm:$0x3]
        %v356 = vld [vmem:[%s296 + $0x180] sm:$0xff]
        %v357 = vld [vmem:[%s296 + $0x188] sm:$0xff]
        %v358 = vld [vmem:[%s296 + $0x190] sm:$0x3]
        %v359 = vld [vmem:[%s296 + $0x198] sm:$0xff]
        %v360 = vld [vmem:[%s296 + $0x1a0] sm:$0xff]
        %v361 = vld [vmem:[%s296 + $0x1a8] sm:$0x3]
        %v362 = vpack.c.bf16 %v309, %v308
        %v363 = vpack.c.bf16 %v312, %v311
        %v364 = vpack.c.bf16 %v315, %v314
        %v365 = vpack.c.bf16 %v318, %v317
        %v366 = vpack.c.bf16 %v321, %v320
        %v367 = vpack.c.bf16 %v324, %v323
        %v368 = vpack.c.bf16 %v327, %v326
        %v369 = vpack.c.bf16 %v330, %v329
        %v370 = vpack.c.bf16 %v333, %v332
        %v371 = vpack.c.bf16 %v336, %v335
        %v372 = vpack.c.bf16 %v339, %v338
        %v373 = vpack.c.bf16 %v342, %v341
        %v374 = vpack.c.bf16 %v345, %v344
        %v375 = vpack.c.bf16 %v348, %v347
        %v376 = vpack.c.bf16 %v351, %v350
        %v377 = vpack.c.bf16 %v354, %v353
        %v378 = vld [vmem:[%s1] sm:$0xf]
        %v379 = vld [vmem:[%s1 + $0x4] sm:$0xf]
        %vm428 = vcmask 1046528
        %v429 = vrot.slane %v308, 1
        %v430 = vrot.slane %v309, 1
        %v431 = vsel %vm428, %v429, %v430
        %v432 = vrot.slane %v310, 1
        %v433 = vsel %vm428, %v430, %v432
        %v434 = vrot.slane %v311, 1
        %v435 = vrot.slane %v312, 1
        %v436 = vsel %vm428, %v434, %v435
        %v437 = vrot.slane %v313, 1
        %v438 = vsel %vm428, %v435, %v437
        %v439 = vrot.slane %v314, 1
        %v440 = vrot.slane %v315, 1
        %v441 = vsel %vm428, %v439, %v440
        %v442 = vrot.slane %v316, 1
        %v443 = vsel %vm428, %v440, %v442
        %v444 = vrot.slane %v317, 1
        %v445 = vrot.slane %v318, 1
        %v446 = vsel %vm428, %v444, %v445
        %v447 = vrot.slane %v319, 1
        %v448 = vsel %vm428, %v445, %v447
        %v449 = vrot.slane %v320, 1
        %v450 = vrot.slane %v321, 1
        %v451 = vsel %vm428, %v449, %v450
        %v452 = vrot.slane %v322, 1
        %v453 = vsel %vm428, %v450, %v452
        %v454 = vrot.slane %v323, 1
        %v455 = vrot.slane %v324, 1
        %v456 = vsel %vm428, %v454, %v455
        %v457 = vrot.slane %v325, 1
        %v458 = vsel %vm428, %v455, %v457
        %v459 = vrot.slane %v326, 1
        %v460 = vrot.slane %v327, 1
        %v461 = vsel %vm428, %v459, %v460
        %v462 = vrot.slane %v328, 1
        %v463 = vsel %vm428, %v460, %v462
        %v464 = vrot.slane %v329, 1
        %v465 = vrot.slane %v330, 1
        %v466 = vsel %vm428, %v464, %v465
        %v467 = vrot.slane %v331, 1
        %v468 = vsel %vm428, %v465, %v467
        %v469 = vrot.slane %v332, 1
        %v470 = vrot.slane %v333, 1
        %v471 = vsel %vm428, %v469, %v470
        %v472 = vrot.slane %v334, 1
        %v473 = vsel %vm428, %v470, %v472
        %v474 = vrot.slane %v335, 1
        %v475 = vrot.slane %v336, 1
        %v476 = vsel %vm428, %v474, %v475
        %v477 = vrot.slane %v337, 1
        %v478 = vsel %vm428, %v475, %v477
        %v479 = vrot.slane %v338, 1
        %v480 = vrot.slane %v339, 1
        %v481 = vsel %vm428, %v479, %v480
        %v482 = vrot.slane %v340, 1
        %v483 = vsel %vm428, %v480, %v482
        %v484 = vrot.slane %v341, 1
        %v485 = vrot.slane %v342, 1
        %v486 = vsel %vm428, %v484, %v485
        %v487 = vrot.slane %v343, 1
        %v488 = vsel %vm428, %v485, %v487
        %v489 = vrot.slane %v344, 1
        %v490 = vrot.slane %v345, 1
        %v491 = vsel %vm428, %v489, %v490
        %v492 = vrot.slane %v346, 1
        %v493 = vsel %vm428, %v490, %v492
        %v494 = vrot.slane %v347, 1
        %v495 = vrot.slane %v348, 1
        %v496 = vsel %vm428, %v494, %v495
        %v497 = vrot.slane %v349, 1
        %v498 = vsel %vm428, %v495, %v497
        %v499 = vrot.slane %v350, 1
        %v500 = vrot.slane %v351, 1
        %v501 = vsel %vm428, %v499, %v500
        %v502 = vrot.slane %v352, 1
        %v503 = vsel %vm428, %v500, %v502
        %v504 = vrot.slane %v353, 1
        %v505 = vrot.slane %v354, 1
        %v506 = vsel %vm428, %v504, %v505
        %v507 = vrot.slane %v355, 1
        %v508 = vsel %vm428, %v505, %v507
        %v541 = vpack.c.bf16 %v433, %v431
        %v542 = vpack.c.bf16 %v438, %v436
        %v543 = vpack.c.bf16 %v443, %v441
        %v544 = vpack.c.bf16 %v448, %v446
        %v545 = vpack.c.bf16 %v453, %v451
        %v546 = vpack.c.bf16 %v458, %v456
        %v547 = vpack.c.bf16 %v463, %v461
        %v548 = vpack.c.bf16 %v468, %v466
        %v549 = vpack.c.bf16 %v473, %v471
        %v550 = vpack.c.bf16 %v478, %v476
        %v551 = vpack.c.bf16 %v483, %v481
        %v552 = vpack.c.bf16 %v488, %v486
        %v553 = vpack.c.bf16 %v493, %v491
        %v554 = vpack.c.bf16 %v498, %v496
        %v555 = vpack.c.bf16 %v503, %v501
        %v556 = vpack.c.bf16 %v508, %v506
        %s557 = scalar_lea.vmem %s1, 8
        %v558 = vld [vmem:[%s557] sm:$0xf]
        %v559 = vld [vmem:[%s557 + $0x4] sm:$0xf]
        %v562 = vunpack.c.l.b16 %v558
        %v563 = vunpack.c.l.b16 %v559
        %v564 = vpack.c.b16 %v563, %v562
        %vm566 = vcmask 130048
        %v568 = vsel %vm566, %v541, 0
        %v571 = vsel %vm566, %v542, 0
        %v574 = vsel %vm566, %v543, 0
        %v577 = vsel %vm566, %v544, 0
        %v580 = vsel %vm566, %v545, 0
        %v583 = vsel %vm566, %v546, 0
        %v586 = vsel %vm566, %v547, 0
        %v589 = vsel %vm566, %v548, 0
        %v592 = vsel %vm566, %v549, 0
        %v595 = vsel %vm566, %v550, 0
        %v598 = vsel %vm566, %v551, 0
        %v601 = vsel %vm566, %v552, 0
        %v604 = vsel %vm566, %v553, 0
        %v607 = vsel %vm566, %v554, 0
        %v610 = vsel %vm566, %v555, 0
        %v613 = vsel %vm566, %v556, 0
        %615 = vmatpush.bf16.msra.mxu0 0
        %616 = vmatpush.bf16.msra.mxu0 0
        %617 = vmatpush.bf16.msra.mxu0 0
        %618 = vmatpush.bf16.msra.mxu0 0
        %619 = vmatpush.bf16.msra.mxu0 0
        %620 = vmatpush.bf16.msra.mxu0 0
        %621 = vmatpush.bf16.msra.mxu0 0
        %622 = vmatpush.bf16.msra.mxu0 %v564
        %623 = vmatmul.bf16.gmra.mxu0 %v568
        %v624 = vpop.f32.mrf.mxu0
        %v625 = vadd.f32 0.0, %v624
        %v626 = vpop.f32.mrf.mxu0
        %v627 = vadd.f32 0.0, %v626
        %628 = vmatmul.bf16.gmra.mxu0 %v571
        %v629 = vpop.f32.mrf.mxu0
        %v630 = vadd.f32 0.0, %v629
        %v631 = vpop.f32.mrf.mxu0
        %v632 = vadd.f32 0.0, %v631
        %633 = vmatmul.bf16.gmra.mxu0 %v574
        %v634 = vpop.f32.mrf.mxu0
        %v635 = vadd.f32 0.0, %v634
        %v636 = vpop.f32.mrf.mxu0
        %v637 = vadd.f32 0.0, %v636
        %638 = vmatmul.bf16.gmra.mxu0 %v577
        %v639 = vpop.f32.mrf.mxu0
        %v640 = vadd.f32 0.0, %v639
        %v641 = vpop.f32.mrf.mxu0
        %v642 = vadd.f32 0.0, %v641
        %643 = vmatmul.bf16.gmra.mxu0 %v580
        %v644 = vpop.f32.mrf.mxu0
        %v645 = vadd.f32 0.0, %v644
        %v646 = vpop.f32.mrf.mxu0
        %v647 = vadd.f32 0.0, %v646
        %648 = vmatmul.bf16.gmra.mxu0 %v583
        %v649 = vpop.f32.mrf.mxu0
        %v650 = vadd.f32 0.0, %v649
        %v651 = vpop.f32.mrf.mxu0
        %v652 = vadd.f32 0.0, %v651
        %653 = vmatmul.bf16.gmra.mxu0 %v586
        %v654 = vpop.f32.mrf.mxu0
        %v655 = vadd.f32 0.0, %v654
        %v656 = vpop.f32.mrf.mxu0
        %v657 = vadd.f32 0.0, %v656
        %658 = vmatmul.bf16.gmra.mxu0 %v589
        %v659 = vpop.f32.mrf.mxu0
        %v660 = vadd.f32 0.0, %v659
        %v661 = vpop.f32.mrf.mxu0
        %v662 = vadd.f32 0.0, %v661
        %663 = vmatmul.bf16.gmra.mxu0 %v592
        %v664 = vpop.f32.mrf.mxu0
        %v665 = vadd.f32 0.0, %v664
        %v666 = vpop.f32.mrf.mxu0
        %v667 = vadd.f32 0.0, %v666
        %668 = vmatmul.bf16.gmra.mxu0 %v595
        %v669 = vpop.f32.mrf.mxu0
        %v670 = vadd.f32 0.0, %v669
        %v671 = vpop.f32.mrf.mxu0
        %v672 = vadd.f32 0.0, %v671
        %673 = vmatmul.bf16.gmra.mxu0 %v598
        %v674 = vpop.f32.mrf.mxu0
        %v675 = vadd.f32 0.0, %v674
        %v676 = vpop.f32.mrf.mxu0
        %v677 = vadd.f32 0.0, %v676
        %678 = vmatmul.bf16.gmra.mxu0 %v601
        %v679 = vpop.f32.mrf.mxu0
        %v680 = vadd.f32 0.0, %v679
        %v681 = vpop.f32.mrf.mxu0
        %v682 = vadd.f32 0.0, %v681
        %683 = vmatmul.bf16.gmra.mxu0 %v604
        %v684 = vpop.f32.mrf.mxu0
        %v685 = vadd.f32 0.0, %v684
        %v686 = vpop.f32.mrf.mxu0
        %v687 = vadd.f32 0.0, %v686
        %688 = vmatmul.bf16.gmra.mxu0 %v607
        %v689 = vpop.f32.mrf.mxu0
        %v690 = vadd.f32 0.0, %v689
        %v691 = vpop.f32.mrf.mxu0
        %v692 = vadd.f32 0.0, %v691
        %693 = vmatmul.bf16.gmra.mxu0 %v610
        %v694 = vpop.f32.mrf.mxu0
        %v695 = vadd.f32 0.0, %v694
        %v696 = vpop.f32.mrf.mxu0
        %v697 = vadd.f32 0.0, %v696
        %698 = vmatmul.bf16.gmra.mxu0 %v613
        %v699 = vpop.f32.mrf.mxu0
        %v700 = vadd.f32 0.0, %v699
        %v701 = vpop.f32.mrf.mxu0
        %v702 = vadd.f32 0.0, %v701
        %703 = vdwg.mxu0
        %v706 = vunpack.c.l.b16 %v378
        %v707 = vunpack.c.l.b16 %v379
        %v708 = vpack.c.b16 %v707, %v706
        %v711 = vsel %vm566, %v362, 0
        %v714 = vsel %vm566, %v363, 0
        %v717 = vsel %vm566, %v364, 0
        %v720 = vsel %vm566, %v365, 0
        %v723 = vsel %vm566, %v366, 0
        %v726 = vsel %vm566, %v367, 0
        %v729 = vsel %vm566, %v368, 0
        %v732 = vsel %vm566, %v369, 0
        %v735 = vsel %vm566, %v370, 0
        %v738 = vsel %vm566, %v371, 0
        %v741 = vsel %vm566, %v372, 0
        %v744 = vsel %vm566, %v373, 0
        %v747 = vsel %vm566, %v374, 0
        %v750 = vsel %vm566, %v375, 0
        %v753 = vsel %vm566, %v376, 0
        %v756 = vsel %vm566, %v377, 0
        %758 = vmatpush.bf16.msra.mxu0 0
        %759 = vmatpush.bf16.msra.mxu0 0
        %760 = vmatpush.bf16.msra.mxu0 0
        %761 = vmatpush.bf16.msra.mxu0 0
        %762 = vmatpush.bf16.msra.mxu0 0
        %763 = vmatpush.bf16.msra.mxu0 0
        %764 = vmatpush.bf16.msra.mxu0 0
        %765 = vmatpush.bf16.msra.mxu0 %v708
        %766 = vmatmul.bf16.gmra.mxu0 %v711
        %v767 = vpop.f32.mrf.mxu0
        %v768 = vadd.f32 %v625, %v767
        %v769 = vpop.f32.mrf.mxu0
        %v770 = vadd.f32 %v627, %v769
        %771 = vmatmul.bf16.gmra.mxu0 %v714
        %v772 = vpop.f32.mrf.mxu0
        %v773 = vadd.f32 %v630, %v772
        %v774 = vpop.f32.mrf.mxu0
        %v775 = vadd.f32 %v632, %v774
        %776 = vmatmul.bf16.gmra.mxu0 %v717
        %v777 = vpop.f32.mrf.mxu0
        %v778 = vadd.f32 %v635, %v777
        %v779 = vpop.f32.mrf.mxu0
        %v780 = vadd.f32 %v637, %v779
        %781 = vmatmul.bf16.gmra.mxu0 %v720
        %v782 = vpop.f32.mrf.mxu0
        %v783 = vadd.f32 %v640, %v782
        %v784 = vpop.f32.mrf.mxu0
        %v785 = vadd.f32 %v642, %v784
        %786 = vmatmul.bf16.gmra.mxu0 %v723
        %v787 = vpop.f32.mrf.mxu0
        %v788 = vadd.f32 %v645, %v787
        %v789 = vpop.f32.mrf.mxu0
        %v790 = vadd.f32 %v647, %v789
        %791 = vmatmul.bf16.gmra.mxu0 %v726
        %v792 = vpop.f32.mrf.mxu0
        %v793 = vadd.f32 %v650, %v792
        %v794 = vpop.f32.mrf.mxu0
        %v795 = vadd.f32 %v652, %v794
        %796 = vmatmul.bf16.gmra.mxu0 %v729
        %v797 = vpop.f32.mrf.mxu0
        %v798 = vadd.f32 %v655, %v797
        %v799 = vpop.f32.mrf.mxu0
        %v800 = vadd.f32 %v657, %v799
        %801 = vmatmul.bf16.gmra.mxu0 %v732
        %v802 = vpop.f32.mrf.mxu0
        %v803 = vadd.f32 %v660, %v802
        %v804 = vpop.f32.mrf.mxu0
        %v805 = vadd.f32 %v662, %v804
        %806 = vmatmul.bf16.gmra.mxu0 %v735
        %v807 = vpop.f32.mrf.mxu0
        %v808 = vadd.f32 %v665, %v807
        %v809 = vpop.f32.mrf.mxu0
        %v810 = vadd.f32 %v667, %v809
        %811 = vmatmul.bf16.gmra.mxu0 %v738
        %v812 = vpop.f32.mrf.mxu0
        %v813 = vadd.f32 %v670, %v812
        %v814 = vpop.f32.mrf.mxu0
        %v815 = vadd.f32 %v672, %v814
        %816 = vmatmul.bf16.gmra.mxu0 %v741
        %v817 = vpop.f32.mrf.mxu0
        %v818 = vadd.f32 %v675, %v817
        %v819 = vpop.f32.mrf.mxu0
        %v820 = vadd.f32 %v677, %v819
        %821 = vmatmul.bf16.gmra.mxu0 %v744
        %v822 = vpop.f32.mrf.mxu0
        %v823 = vadd.f32 %v680, %v822
        %v824 = vpop.f32.mrf.mxu0
        %v825 = vadd.f32 %v682, %v824
        %826 = vmatmul.bf16.gmra.mxu0 %v747
        %v827 = vpop.f32.mrf.mxu0
        %v828 = vadd.f32 %v685, %v827
        %v829 = vpop.f32.mrf.mxu0
        %v830 = vadd.f32 %v687, %v829
        %831 = vmatmul.bf16.gmra.mxu0 %v750
        %v832 = vpop.f32.mrf.mxu0
        %v833 = vadd.f32 %v690, %v832
        %v834 = vpop.f32.mrf.mxu0
        %v835 = vadd.f32 %v692, %v834
        %836 = vmatmul.bf16.gmra.mxu0 %v753
        %v837 = vpop.f32.mrf.mxu0
        %v838 = vadd.f32 %v695, %v837
        %v839 = vpop.f32.mrf.mxu0
        %v840 = vadd.f32 %v697, %v839
        %841 = vmatmul.bf16.gmra.mxu0 %v756
        %v842 = vpop.f32.mrf.mxu0
        %v843 = vadd.f32 %v700, %v842
        %v844 = vpop.f32.mrf.mxu0
        %v845 = vadd.f32 %v702, %v844
        %846 = vdwg.mxu0
        %vm847 = vcmask 1045504
        %v848 = vrot.slane %v308, 2
        %v849 = vrot.slane %v309, 2
        %v850 = vsel %vm847, %v848, %v849
        %v851 = vrot.slane %v310, 2
        %v852 = vsel %vm847, %v849, %v851
        %v853 = vrot.slane %v311, 2
        %v854 = vrot.slane %v312, 2
        %v855 = vsel %vm847, %v853, %v854
        %v856 = vrot.slane %v313, 2
        %v857 = vsel %vm847, %v854, %v856
        %v858 = vrot.slane %v314, 2
        %v859 = vrot.slane %v315, 2
        %v860 = vsel %vm847, %v858, %v859
        %v861 = vrot.slane %v316, 2
        %v862 = vsel %vm847, %v859, %v861
        %v863 = vrot.slane %v317, 2
        %v864 = vrot.slane %v318, 2
        %v865 = vsel %vm847, %v863, %v864
        %v866 = vrot.slane %v319, 2
        %v867 = vsel %vm847, %v864, %v866
        %v868 = vrot.slane %v320, 2
        %v869 = vrot.slane %v321, 2
        %v870 = vsel %vm847, %v868, %v869
        %v871 = vrot.slane %v322, 2
        %v872 = vsel %vm847, %v869, %v871
        %v873 = vrot.slane %v323, 2
        %v874 = vrot.slane %v324, 2
        %v875 = vsel %vm847, %v873, %v874
        %v876 = vrot.slane %v325, 2
        %v877 = vsel %vm847, %v874, %v876
        %v878 = vrot.slane %v326, 2
        %v879 = vrot.slane %v327, 2
        %v880 = vsel %vm847, %v878, %v879
        %v881 = vrot.slane %v328, 2
        %v882 = vsel %vm847, %v879, %v881
        %v883 = vrot.slane %v329, 2
        %v884 = vrot.slane %v330, 2
        %v885 = vsel %vm847, %v883, %v884
        %v886 = vrot.slane %v331, 2
        %v887 = vsel %vm847, %v884, %v886
        %v888 = vrot.slane %v332, 2
        %v889 = vrot.slane %v333, 2
        %v890 = vsel %vm847, %v888, %v889
        %v891 = vrot.slane %v334, 2
        %v892 = vsel %vm847, %v889, %v891
        %v893 = vrot.slane %v335, 2
        %v894 = vrot.slane %v336, 2
        %v895 = vsel %vm847, %v893, %v894
        %v896 = vrot.slane %v337, 2
        %v897 = vsel %vm847, %v894, %v896
        %v898 = vrot.slane %v338, 2
        %v899 = vrot.slane %v339, 2
        %v900 = vsel %vm847, %v898, %v899
        %v901 = vrot.slane %v340, 2
        %v902 = vsel %vm847, %v899, %v901
        %v903 = vrot.slane %v341, 2
        %v904 = vrot.slane %v342, 2
        %v905 = vsel %vm847, %v903, %v904
        %v906 = vrot.slane %v343, 2
        %v907 = vsel %vm847, %v904, %v906
        %v908 = vrot.slane %v344, 2
        %v909 = vrot.slane %v345, 2
        %v910 = vsel %vm847, %v908, %v909
        %v911 = vrot.slane %v346, 2
        %v912 = vsel %vm847, %v909, %v911
        %v913 = vrot.slane %v347, 2
        %v914 = vrot.slane %v348, 2
        %v915 = vsel %vm847, %v913, %v914
        %v916 = vrot.slane %v349, 2
        %v917 = vsel %vm847, %v914, %v916
        %v918 = vrot.slane %v350, 2
        %v919 = vrot.slane %v351, 2
        %v920 = vsel %vm847, %v918, %v919
        %v921 = vrot.slane %v352, 2
        %v922 = vsel %vm847, %v919, %v921
        %v923 = vrot.slane %v353, 2
        %v924 = vrot.slane %v354, 2
        %v925 = vsel %vm847, %v923, %v924
        %v926 = vrot.slane %v355, 2
        %v927 = vsel %vm847, %v924, %v926
        %v960 = vpack.c.bf16 %v852, %v850
        %v961 = vpack.c.bf16 %v857, %v855
        %v962 = vpack.c.bf16 %v862, %v860
        %v963 = vpack.c.bf16 %v867, %v865
        %v964 = vpack.c.bf16 %v872, %v870
        %v965 = vpack.c.bf16 %v877, %v875
        %v966 = vpack.c.bf16 %v882, %v880
        %v967 = vpack.c.bf16 %v887, %v885
        %v968 = vpack.c.bf16 %v892, %v890
        %v969 = vpack.c.bf16 %v897, %v895
        %v970 = vpack.c.bf16 %v902, %v900
        %v971 = vpack.c.bf16 %v907, %v905
        %v972 = vpack.c.bf16 %v912, %v910
        %v973 = vpack.c.bf16 %v917, %v915
        %v974 = vpack.c.bf16 %v922, %v920
        %v975 = vpack.c.bf16 %v927, %v925
        %s976 = scalar_lea.vmem %s1, 16
        %v977 = vld [vmem:[%s976] sm:$0xf]
        %v978 = vld [vmem:[%s976 + $0x4] sm:$0xf]
        %v981 = vunpack.c.l.b16 %v977
        %v982 = vunpack.c.l.b16 %v978
        %v983 = vpack.c.b16 %v982, %v981
        %v986 = vsel %vm566, %v960, 0
        %v989 = vsel %vm566, %v961, 0
        %v992 = vsel %vm566, %v962, 0
        %v995 = vsel %vm566, %v963, 0
        %v998 = vsel %vm566, %v964, 0
        %v1001 = vsel %vm566, %v965, 0
        %v1004 = vsel %vm566, %v966, 0
        %v1007 = vsel %vm566, %v967, 0
        %v1010 = vsel %vm566, %v968, 0
        %v1013 = vsel %vm566, %v969, 0
        %v1016 = vsel %vm566, %v970, 0
        %v1019 = vsel %vm566, %v971, 0
        %v1022 = vsel %vm566, %v972, 0
        %v1025 = vsel %vm566, %v973, 0
        %v1028 = vsel %vm566, %v974, 0
        %v1031 = vsel %vm566, %v975, 0
        %1033 = vmatpush.bf16.msra.mxu0 0
        %1034 = vmatpush.bf16.msra.mxu0 0
        %1035 = vmatpush.bf16.msra.mxu0 0
        %1036 = vmatpush.bf16.msra.mxu0 0
        %1037 = vmatpush.bf16.msra.mxu0 0
        %1038 = vmatpush.bf16.msra.mxu0 0
        %1039 = vmatpush.bf16.msra.mxu0 0
        %1040 = vmatpush.bf16.msra.mxu0 %v983
        %1041 = vmatmul.bf16.gmra.mxu0 %v986
        %v1042 = vpop.f32.mrf.mxu0
        %v1043 = vadd.f32 0.0, %v1042
        %v1044 = vpop.f32.mrf.mxu0
        %v1045 = vadd.f32 0.0, %v1044
        %1046 = vmatmul.bf16.gmra.mxu0 %v989
        %v1047 = vpop.f32.mrf.mxu0
        %v1048 = vadd.f32 0.0, %v1047
        %v1049 = vpop.f32.mrf.mxu0
        %v1050 = vadd.f32 0.0, %v1049
        %1051 = vmatmul.bf16.gmra.mxu0 %v992
        %v1052 = vpop.f32.mrf.mxu0
        %v1053 = vadd.f32 0.0, %v1052
        %v1054 = vpop.f32.mrf.mxu0
        %v1055 = vadd.f32 0.0, %v1054
        %1056 = vmatmul.bf16.gmra.mxu0 %v995
        %v1057 = vpop.f32.mrf.mxu0
        %v1058 = vadd.f32 0.0, %v1057
        %v1059 = vpop.f32.mrf.mxu0
        %v1060 = vadd.f32 0.0, %v1059
        %1061 = vmatmul.bf16.gmra.mxu0 %v998
        %v1062 = vpop.f32.mrf.mxu0
        %v1063 = vadd.f32 0.0, %v1062
        %v1064 = vpop.f32.mrf.mxu0
        %v1065 = vadd.f32 0.0, %v1064
        %1066 = vmatmul.bf16.gmra.mxu0 %v1001
        %v1067 = vpop.f32.mrf.mxu0
        %v1068 = vadd.f32 0.0, %v1067
        %v1069 = vpop.f32.mrf.mxu0
        %v1070 = vadd.f32 0.0, %v1069
        %1071 = vmatmul.bf16.gmra.mxu0 %v1004
        %v1072 = vpop.f32.mrf.mxu0
        %v1073 = vadd.f32 0.0, %v1072
        %v1074 = vpop.f32.mrf.mxu0
        %v1075 = vadd.f32 0.0, %v1074
        %1076 = vmatmul.bf16.gmra.mxu0 %v1007
        %v1077 = vpop.f32.mrf.mxu0
        %v1078 = vadd.f32 0.0, %v1077
        %v1079 = vpop.f32.mrf.mxu0
        %v1080 = vadd.f32 0.0, %v1079
        %1081 = vmatmul.bf16.gmra.mxu0 %v1010
        %v1082 = vpop.f32.mrf.mxu0
        %v1083 = vadd.f32 0.0, %v1082
        %v1084 = vpop.f32.mrf.mxu0
        %v1085 = vadd.f32 0.0, %v1084
        %1086 = vmatmul.bf16.gmra.mxu0 %v1013
        %v1087 = vpop.f32.mrf.mxu0
        %v1088 = vadd.f32 0.0, %v1087
        %v1089 = vpop.f32.mrf.mxu0
        %v1090 = vadd.f32 0.0, %v1089
        %1091 = vmatmul.bf16.gmra.mxu0 %v1016
        %v1092 = vpop.f32.mrf.mxu0
        %v1093 = vadd.f32 0.0, %v1092
        %v1094 = vpop.f32.mrf.mxu0
        %v1095 = vadd.f32 0.0, %v1094
        %1096 = vmatmul.bf16.gmra.mxu0 %v1019
        %v1097 = vpop.f32.mrf.mxu0
        %v1098 = vadd.f32 0.0, %v1097
        %v1099 = vpop.f32.mrf.mxu0
        %v1100 = vadd.f32 0.0, %v1099
        %1101 = vmatmul.bf16.gmra.mxu0 %v1022
        %v1102 = vpop.f32.mrf.mxu0
        %v1103 = vadd.f32 0.0, %v1102
        %v1104 = vpop.f32.mrf.mxu0
        %v1105 = vadd.f32 0.0, %v1104
        %1106 = vmatmul.bf16.gmra.mxu0 %v1025
        %v1107 = vpop.f32.mrf.mxu0
        %v1108 = vadd.f32 0.0, %v1107
        %v1109 = vpop.f32.mrf.mxu0
        %v1110 = vadd.f32 0.0, %v1109
        %1111 = vmatmul.bf16.gmra.mxu0 %v1028
        %v1112 = vpop.f32.mrf.mxu0
        %v1113 = vadd.f32 0.0, %v1112
        %v1114 = vpop.f32.mrf.mxu0
        %v1115 = vadd.f32 0.0, %v1114
        %1116 = vmatmul.bf16.gmra.mxu0 %v1031
        %v1117 = vpop.f32.mrf.mxu0
        %v1118 = vadd.f32 0.0, %v1117
        %v1119 = vpop.f32.mrf.mxu0
        %v1120 = vadd.f32 0.0, %v1119
        %1121 = vdwg.mxu0
        %v1122 = vadd.f32 %v768, %v1043
        %v1123 = vadd.f32 %v770, %v1045
        %v1124 = vadd.f32 %v773, %v1048
        %v1125 = vadd.f32 %v775, %v1050
        %v1126 = vadd.f32 %v778, %v1053
        %v1127 = vadd.f32 %v780, %v1055
        %v1128 = vadd.f32 %v783, %v1058
        %v1129 = vadd.f32 %v785, %v1060
        %v1130 = vadd.f32 %v788, %v1063
        %v1131 = vadd.f32 %v790, %v1065
        %v1132 = vadd.f32 %v793, %v1068
        %v1133 = vadd.f32 %v795, %v1070
        %v1134 = vadd.f32 %v798, %v1073
        %v1135 = vadd.f32 %v800, %v1075
        %v1136 = vadd.f32 %v803, %v1078
        %v1137 = vadd.f32 %v805, %v1080
        %v1138 = vadd.f32 %v808, %v1083
        %v1139 = vadd.f32 %v810, %v1085
        %v1140 = vadd.f32 %v813, %v1088
        %v1141 = vadd.f32 %v815, %v1090
        %v1142 = vadd.f32 %v818, %v1093
        %v1143 = vadd.f32 %v820, %v1095
        %v1144 = vadd.f32 %v823, %v1098
        %v1145 = vadd.f32 %v825, %v1100
        %v1146 = vadd.f32 %v828, %v1103
        %v1147 = vadd.f32 %v830, %v1105
        %v1148 = vadd.f32 %v833, %v1108
        %v1149 = vadd.f32 %v835, %v1110
        %v1150 = vadd.f32 %v838, %v1113
        %v1151 = vadd.f32 %v840, %v1115
        %v1152 = vadd.f32 %v843, %v1118
        %v1153 = vadd.f32 %v845, %v1120
        %v1154 = vpack.c.bf16 %v357, %v356
        %s1155 = scalar_lea.vmem %s1, 24
        %v1156 = vld [vmem:[%s1155] sm:$0xf]
        %v1157 = vld [vmem:[%s1155 + $0x4] sm:$0xf]
        %v1160 = vunpack.c.l.b16 %v1156
        %v1161 = vunpack.c.l.b16 %v1157
        %v1162 = vpack.c.b16 %v1161, %v1160
        %v1165 = vsel %vm566, %v1154, 0
        %1167 = vmatpush.bf16.msra.mxu0 0
        %1168 = vmatpush.bf16.msra.mxu0 0
        %1169 = vmatpush.bf16.msra.mxu0 0
        %1170 = vmatpush.bf16.msra.mxu0 0
        %1171 = vmatpush.bf16.msra.mxu0 0
        %1172 = vmatpush.bf16.msra.mxu0 0
        %1173 = vmatpush.bf16.msra.mxu0 0
        %1174 = vmatpush.bf16.msra.mxu0 %v1162
        %1175 = vmatmul.bf16.gmra.mxu0 %v714
        %v1176 = vpop.f32.mrf.mxu0
        %v1177 = vadd.f32 0.0, %v1176
        %v1178 = vpop.f32.mrf.mxu0
        %v1179 = vadd.f32 0.0, %v1178
        %1180 = vmatmul.bf16.gmra.mxu0 %v717
        %v1181 = vpop.f32.mrf.mxu0
        %v1182 = vadd.f32 0.0, %v1181
        %v1183 = vpop.f32.mrf.mxu0
        %v1184 = vadd.f32 0.0, %v1183
        %1185 = vmatmul.bf16.gmra.mxu0 %v720
        %v1186 = vpop.f32.mrf.mxu0
        %v1187 = vadd.f32 0.0, %v1186
        %v1188 = vpop.f32.mrf.mxu0
        %v1189 = vadd.f32 0.0, %v1188
        %1190 = vmatmul.bf16.gmra.mxu0 %v723
        %v1191 = vpop.f32.mrf.mxu0
        %v1192 = vadd.f32 0.0, %v1191
        %v1193 = vpop.f32.mrf.mxu0
        %v1194 = vadd.f32 0.0, %v1193
        %1195 = vmatmul.bf16.gmra.mxu0 %v726
        %v1196 = vpop.f32.mrf.mxu0
        %v1197 = vadd.f32 0.0, %v1196
        %v1198 = vpop.f32.mrf.mxu0
        %v1199 = vadd.f32 0.0, %v1198
        %1200 = vmatmul.bf16.gmra.mxu0 %v729
        %v1201 = vpop.f32.mrf.mxu0
        %v1202 = vadd.f32 0.0, %v1201
        %v1203 = vpop.f32.mrf.mxu0
        %v1204 = vadd.f32 0.0, %v1203
        %1205 = vmatmul.bf16.gmra.mxu0 %v732
        %v1206 = vpop.f32.mrf.mxu0
        %v1207 = vadd.f32 0.0, %v1206
        %v1208 = vpop.f32.mrf.mxu0
        %v1209 = vadd.f32 0.0, %v1208
        %1210 = vmatmul.bf16.gmra.mxu0 %v735
        %v1211 = vpop.f32.mrf.mxu0
        %v1212 = vadd.f32 0.0, %v1211
        %v1213 = vpop.f32.mrf.mxu0
        %v1214 = vadd.f32 0.0, %v1213
        %1215 = vmatmul.bf16.gmra.mxu0 %v738
        %v1216 = vpop.f32.mrf.mxu0
        %v1217 = vadd.f32 0.0, %v1216
        %v1218 = vpop.f32.mrf.mxu0
        %v1219 = vadd.f32 0.0, %v1218
        %1220 = vmatmul.bf16.gmra.mxu0 %v741
        %v1221 = vpop.f32.mrf.mxu0
        %v1222 = vadd.f32 0.0, %v1221
        %v1223 = vpop.f32.mrf.mxu0
        %v1224 = vadd.f32 0.0, %v1223
        %1225 = vmatmul.bf16.gmra.mxu0 %v744
        %v1226 = vpop.f32.mrf.mxu0
        %v1227 = vadd.f32 0.0, %v1226
        %v1228 = vpop.f32.mrf.mxu0
        %v1229 = vadd.f32 0.0, %v1228
        %1230 = vmatmul.bf16.gmra.mxu0 %v747
        %v1231 = vpop.f32.mrf.mxu0
        %v1232 = vadd.f32 0.0, %v1231
        %v1233 = vpop.f32.mrf.mxu0
        %v1234 = vadd.f32 0.0, %v1233
        %1235 = vmatmul.bf16.gmra.mxu0 %v750
        %v1236 = vpop.f32.mrf.mxu0
        %v1237 = vadd.f32 0.0, %v1236
        %v1238 = vpop.f32.mrf.mxu0
        %v1239 = vadd.f32 0.0, %v1238
        %1240 = vmatmul.bf16.gmra.mxu0 %v753
        %v1241 = vpop.f32.mrf.mxu0
        %v1242 = vadd.f32 0.0, %v1241
        %v1243 = vpop.f32.mrf.mxu0
        %v1244 = vadd.f32 0.0, %v1243
        %1245 = vmatmul.bf16.gmra.mxu0 %v756
        %v1246 = vpop.f32.mrf.mxu0
        %v1247 = vadd.f32 0.0, %v1246
        %v1248 = vpop.f32.mrf.mxu0
        %v1249 = vadd.f32 0.0, %v1248
        %1250 = vmatmul.bf16.gmra.mxu0 %v1165
        %v1251 = vpop.f32.mrf.mxu0
        %v1252 = vadd.f32 0.0, %v1251
        %v1253 = vpop.f32.mrf.mxu0
        %v1254 = vadd.f32 0.0, %v1253
        %1255 = vdwg.mxu0
        %v1256 = vadd.f32 %v1122, %v1177
        %v1257 = vadd.f32 %v1123, %v1179
        %v1258 = vadd.f32 %v1124, %v1182
        %v1259 = vadd.f32 %v1125, %v1184
        %v1260 = vadd.f32 %v1126, %v1187
        %v1261 = vadd.f32 %v1127, %v1189
        %v1262 = vadd.f32 %v1128, %v1192
        %v1263 = vadd.f32 %v1129, %v1194
        %v1264 = vadd.f32 %v1130, %v1197
        %v1265 = vadd.f32 %v1131, %v1199
        %v1266 = vadd.f32 %v1132, %v1202
        %v1267 = vadd.f32 %v1133, %v1204
        %v1268 = vadd.f32 %v1134, %v1207
        %v1269 = vadd.f32 %v1135, %v1209
        %v1270 = vadd.f32 %v1136, %v1212
        %v1271 = vadd.f32 %v1137, %v1214
        %v1272 = vadd.f32 %v1138, %v1217
        %v1273 = vadd.f32 %v1139, %v1219
        %v1274 = vadd.f32 %v1140, %v1222
        %v1275 = vadd.f32 %v1141, %v1224
        %v1276 = vadd.f32 %v1142, %v1227
        %v1277 = vadd.f32 %v1143, %v1229
        %v1278 = vadd.f32 %v1144, %v1232
        %v1279 = vadd.f32 %v1145, %v1234
        %v1280 = vadd.f32 %v1146, %v1237
        %v1281 = vadd.f32 %v1147, %v1239
        %v1282 = vadd.f32 %v1148, %v1242
        %v1283 = vadd.f32 %v1149, %v1244
        %v1284 = vadd.f32 %v1150, %v1247
        %v1285 = vadd.f32 %v1151, %v1249
        %v1286 = vadd.f32 %v1152, %v1252
        %v1287 = vadd.f32 %v1153, %v1254
        %v1291 = vrot.slane %v356, 1
        %v1292 = vrot.slane %v357, 1
        %v1293 = vsel %vm428, %v1291, %v1292
        %v1294 = vrot.slane %v358, 1
        %v1295 = vsel %vm428, %v1292, %v1294
        %v1298 = vpack.c.bf16 %v1295, %v1293
        %s1299 = scalar_lea.vmem %s1, 32
        %v1300 = vld [vmem:[%s1299] sm:$0xf]
        %v1301 = vld [vmem:[%s1299 + $0x4] sm:$0xf]
        %v1304 = vunpack.c.l.b16 %v1300
        %v1305 = vunpack.c.l.b16 %v1301
        %v1306 = vpack.c.b16 %v1305, %v1304
        %v1309 = vsel %vm566, %v1298, 0
        %1311 = vmatpush.bf16.msra.mxu0 0
        %1312 = vmatpush.bf16.msra.mxu0 0
        %1313 = vmatpush.bf16.msra.mxu0 0
        %1314 = vmatpush.bf16.msra.mxu0 0
        %1315 = vmatpush.bf16.msra.mxu0 0
        %1316 = vmatpush.bf16.msra.mxu0 0
        %1317 = vmatpush.bf16.msra.mxu0 0
        %1318 = vmatpush.bf16.msra.mxu0 %v1306
        %1319 = vmatmul.bf16.gmra.mxu0 %v571
        %v1320 = vpop.f32.mrf.mxu0
        %v1321 = vadd.f32 0.0, %v1320
        %v1322 = vpop.f32.mrf.mxu0
        %v1323 = vadd.f32 0.0, %v1322
        %1324 = vmatmul.bf16.gmra.mxu0 %v574
        %v1325 = vpop.f32.mrf.mxu0
        %v1326 = vadd.f32 0.0, %v1325
        %v1327 = vpop.f32.mrf.mxu0
        %v1328 = vadd.f32 0.0, %v1327
        %1329 = vmatmul.bf16.gmra.mxu0 %v577
        %v1330 = vpop.f32.mrf.mxu0
        %v1331 = vadd.f32 0.0, %v1330
        %v1332 = vpop.f32.mrf.mxu0
        %v1333 = vadd.f32 0.0, %v1332
        %1334 = vmatmul.bf16.gmra.mxu0 %v580
        %v1335 = vpop.f32.mrf.mxu0
        %v1336 = vadd.f32 0.0, %v1335
        %v1337 = vpop.f32.mrf.mxu0
        %v1338 = vadd.f32 0.0, %v1337
        %1339 = vmatmul.bf16.gmra.mxu0 %v583
        %v1340 = vpop.f32.mrf.mxu0
        %v1341 = vadd.f32 0.0, %v1340
        %v1342 = vpop.f32.mrf.mxu0
        %v1343 = vadd.f32 0.0, %v1342
        %1344 = vmatmul.bf16.gmra.mxu0 %v586
        %v1345 = vpop.f32.mrf.mxu0
        %v1346 = vadd.f32 0.0, %v1345
        %v1347 = vpop.f32.mrf.mxu0
        %v1348 = vadd.f32 0.0, %v1347
        %1349 = vmatmul.bf16.gmra.mxu0 %v589
        %v1350 = vpop.f32.mrf.mxu0
        %v1351 = vadd.f32 0.0, %v1350
        %v1352 = vpop.f32.mrf.mxu0
        %v1353 = vadd.f32 0.0, %v1352
        %1354 = vmatmul.bf16.gmra.mxu0 %v592
        %v1355 = vpop.f32.mrf.mxu0
        %v1356 = vadd.f32 0.0, %v1355
        %v1357 = vpop.f32.mrf.mxu0
        %v1358 = vadd.f32 0.0, %v1357
        %1359 = vmatmul.bf16.gmra.mxu0 %v595
        %v1360 = vpop.f32.mrf.mxu0
        %v1361 = vadd.f32 0.0, %v1360
        %v1362 = vpop.f32.mrf.mxu0
        %v1363 = vadd.f32 0.0, %v1362
        %1364 = vmatmul.bf16.gmra.mxu0 %v598
        %v1365 = vpop.f32.mrf.mxu0
        %v1366 = vadd.f32 0.0, %v1365
        %v1367 = vpop.f32.mrf.mxu0
        %v1368 = vadd.f32 0.0, %v1367
        %1369 = vmatmul.bf16.gmra.mxu0 %v601
        %v1370 = vpop.f32.mrf.mxu0
        %v1371 = vadd.f32 0.0, %v1370
        %v1372 = vpop.f32.mrf.mxu0
        %v1373 = vadd.f32 0.0, %v1372
        %1374 = vmatmul.bf16.gmra.mxu0 %v604
        %v1375 = vpop.f32.mrf.mxu0
        %v1376 = vadd.f32 0.0, %v1375
        %v1377 = vpop.f32.mrf.mxu0
        %v1378 = vadd.f32 0.0, %v1377
        %1379 = vmatmul.bf16.gmra.mxu0 %v607
        %v1380 = vpop.f32.mrf.mxu0
        %v1381 = vadd.f32 0.0, %v1380
        %v1382 = vpop.f32.mrf.mxu0
        %v1383 = vadd.f32 0.0, %v1382
        %1384 = vmatmul.bf16.gmra.mxu0 %v610
        %v1385 = vpop.f32.mrf.mxu0
        %v1386 = vadd.f32 0.0, %v1385
        %v1387 = vpop.f32.mrf.mxu0
        %v1388 = vadd.f32 0.0, %v1387
        %1389 = vmatmul.bf16.gmra.mxu0 %v613
        %v1390 = vpop.f32.mrf.mxu0
        %v1391 = vadd.f32 0.0, %v1390
        %v1392 = vpop.f32.mrf.mxu0
        %v1393 = vadd.f32 0.0, %v1392
        %1394 = vmatmul.bf16.gmra.mxu0 %v1309
        %v1395 = vpop.f32.mrf.mxu0
        %v1396 = vadd.f32 0.0, %v1395
        %v1397 = vpop.f32.mrf.mxu0
        %v1398 = vadd.f32 0.0, %v1397
        %1399 = vdwg.mxu0
        %v1400 = vadd.f32 %v1256, %v1321
        %v1401 = vadd.f32 %v1257, %v1323
        %v1402 = vadd.f32 %v1258, %v1326
        %v1403 = vadd.f32 %v1259, %v1328
        %v1404 = vadd.f32 %v1260, %v1331
        %v1405 = vadd.f32 %v1261, %v1333
        %v1406 = vadd.f32 %v1262, %v1336
        %v1407 = vadd.f32 %v1263, %v1338
        %v1408 = vadd.f32 %v1264, %v1341
        %v1409 = vadd.f32 %v1265, %v1343
        %v1410 = vadd.f32 %v1266, %v1346
        %v1411 = vadd.f32 %v1267, %v1348
        %v1412 = vadd.f32 %v1268, %v1351
        %v1413 = vadd.f32 %v1269, %v1353
        %v1414 = vadd.f32 %v1270, %v1356
        %v1415 = vadd.f32 %v1271, %v1358
        %v1416 = vadd.f32 %v1272, %v1361
        %v1417 = vadd.f32 %v1273, %v1363
        %v1418 = vadd.f32 %v1274, %v1366
        %v1419 = vadd.f32 %v1275, %v1368
        %v1420 = vadd.f32 %v1276, %v1371
        %v1421 = vadd.f32 %v1277, %v1373
        %v1422 = vadd.f32 %v1278, %v1376
        %v1423 = vadd.f32 %v1279, %v1378
        %v1424 = vadd.f32 %v1280, %v1381
        %v1425 = vadd.f32 %v1281, %v1383
        %v1426 = vadd.f32 %v1282, %v1386
        %v1427 = vadd.f32 %v1283, %v1388
        %v1428 = vadd.f32 %v1284, %v1391
        %v1429 = vadd.f32 %v1285, %v1393
        %v1430 = vadd.f32 %v1286, %v1396
        %v1431 = vadd.f32 %v1287, %v1398
        %v1432 = vrot.slane %v356, 2
        %v1433 = vrot.slane %v357, 2
        %v1434 = vsel %vm847, %v1432, %v1433
        %v1435 = vrot.slane %v358, 2
        %v1436 = vsel %vm847, %v1433, %v1435
        %v1439 = vpack.c.bf16 %v1436, %v1434
        %s1440 = scalar_lea.vmem %s1, 40
        %v1441 = vld [vmem:[%s1440] sm:$0xf]
        %v1442 = vld [vmem:[%s1440 + $0x4] sm:$0xf]
        %v1445 = vunpack.c.l.b16 %v1441
        %v1446 = vunpack.c.l.b16 %v1442
        %v1447 = vpack.c.b16 %v1446, %v1445
        %v1450 = vsel %vm566, %v1439, 0
        %1452 = vmatpush.bf16.msra.mxu0 0
        %1453 = vmatpush.bf16.msra.mxu0 0
        %1454 = vmatpush.bf16.msra.mxu0 0
        %1455 = vmatpush.bf16.msra.mxu0 0
        %1456 = vmatpush.bf16.msra.mxu0 0
        %1457 = vmatpush.bf16.msra.mxu0 0
        %1458 = vmatpush.bf16.msra.mxu0 0
        %1459 = vmatpush.bf16.msra.mxu0 %v1447
        %1460 = vmatmul.bf16.gmra.mxu0 %v989
        %v1461 = vpop.f32.mrf.mxu0
        %v1462 = vadd.f32 0.0, %v1461
        %v1463 = vpop.f32.mrf.mxu0
        %v1464 = vadd.f32 0.0, %v1463
        %1465 = vmatmul.bf16.gmra.mxu0 %v992
        %v1466 = vpop.f32.mrf.mxu0
        %v1467 = vadd.f32 0.0, %v1466
        %v1468 = vpop.f32.mrf.mxu0
        %v1469 = vadd.f32 0.0, %v1468
        %1470 = vmatmul.bf16.gmra.mxu0 %v995
        %v1471 = vpop.f32.mrf.mxu0
        %v1472 = vadd.f32 0.0, %v1471
        %v1473 = vpop.f32.mrf.mxu0
        %v1474 = vadd.f32 0.0, %v1473
        %1475 = vmatmul.bf16.gmra.mxu0 %v998
        %v1476 = vpop.f32.mrf.mxu0
        %v1477 = vadd.f32 0.0, %v1476
        %v1478 = vpop.f32.mrf.mxu0
        %v1479 = vadd.f32 0.0, %v1478
        %1480 = vmatmul.bf16.gmra.mxu0 %v1001
        %v1481 = vpop.f32.mrf.mxu0
        %v1482 = vadd.f32 0.0, %v1481
        %v1483 = vpop.f32.mrf.mxu0
        %v1484 = vadd.f32 0.0, %v1483
        %1485 = vmatmul.bf16.gmra.mxu0 %v1004
        %v1486 = vpop.f32.mrf.mxu0
        %v1487 = vadd.f32 0.0, %v1486
        %v1488 = vpop.f32.mrf.mxu0
        %v1489 = vadd.f32 0.0, %v1488
        %1490 = vmatmul.bf16.gmra.mxu0 %v1007
        %v1491 = vpop.f32.mrf.mxu0
        %v1492 = vadd.f32 0.0, %v1491
        %v1493 = vpop.f32.mrf.mxu0
        %v1494 = vadd.f32 0.0, %v1493
        %1495 = vmatmul.bf16.gmra.mxu0 %v1010
        %v1496 = vpop.f32.mrf.mxu0
        %v1497 = vadd.f32 0.0, %v1496
        %v1498 = vpop.f32.mrf.mxu0
        %v1499 = vadd.f32 0.0, %v1498
        %1500 = vmatmul.bf16.gmra.mxu0 %v1013
        %v1501 = vpop.f32.mrf.mxu0
        %v1502 = vadd.f32 0.0, %v1501
        %v1503 = vpop.f32.mrf.mxu0
        %v1504 = vadd.f32 0.0, %v1503
        %1505 = vmatmul.bf16.gmra.mxu0 %v1016
        %v1506 = vpop.f32.mrf.mxu0
        %v1507 = vadd.f32 0.0, %v1506
        %v1508 = vpop.f32.mrf.mxu0
        %v1509 = vadd.f32 0.0, %v1508
        %1510 = vmatmul.bf16.gmra.mxu0 %v1019
        %v1511 = vpop.f32.mrf.mxu0
        %v1512 = vadd.f32 0.0, %v1511
        %v1513 = vpop.f32.mrf.mxu0
        %v1514 = vadd.f32 0.0, %v1513
        %1515 = vmatmul.bf16.gmra.mxu0 %v1022
        %v1516 = vpop.f32.mrf.mxu0
        %v1517 = vadd.f32 0.0, %v1516
        %v1518 = vpop.f32.mrf.mxu0
        %v1519 = vadd.f32 0.0, %v1518
        %1520 = vmatmul.bf16.gmra.mxu0 %v1025
        %v1521 = vpop.f32.mrf.mxu0
        %v1522 = vadd.f32 0.0, %v1521
        %v1523 = vpop.f32.mrf.mxu0
        %v1524 = vadd.f32 0.0, %v1523
        %1525 = vmatmul.bf16.gmra.mxu0 %v1028
        %v1526 = vpop.f32.mrf.mxu0
        %v1527 = vadd.f32 0.0, %v1526
        %v1528 = vpop.f32.mrf.mxu0
        %v1529 = vadd.f32 0.0, %v1528
        %1530 = vmatmul.bf16.gmra.mxu0 %v1031
        %v1531 = vpop.f32.mrf.mxu0
        %v1532 = vadd.f32 0.0, %v1531
        %v1533 = vpop.f32.mrf.mxu0
        %v1534 = vadd.f32 0.0, %v1533
        %1535 = vmatmul.bf16.gmra.mxu0 %v1450
        %v1536 = vpop.f32.mrf.mxu0
        %v1537 = vadd.f32 0.0, %v1536
        %v1538 = vpop.f32.mrf.mxu0
        %v1539 = vadd.f32 0.0, %v1538
        %1540 = vdwg.mxu0
        %v1541 = vadd.f32 %v1400, %v1462
        %v1542 = vadd.f32 %v1401, %v1464
        %v1543 = vadd.f32 %v1402, %v1467
        %v1544 = vadd.f32 %v1403, %v1469
        %v1545 = vadd.f32 %v1404, %v1472
        %v1546 = vadd.f32 %v1405, %v1474
        %v1547 = vadd.f32 %v1406, %v1477
        %v1548 = vadd.f32 %v1407, %v1479
        %v1549 = vadd.f32 %v1408, %v1482
        %v1550 = vadd.f32 %v1409, %v1484
        %v1551 = vadd.f32 %v1410, %v1487
        %v1552 = vadd.f32 %v1411, %v1489
        %v1553 = vadd.f32 %v1412, %v1492
        %v1554 = vadd.f32 %v1413, %v1494
        %v1555 = vadd.f32 %v1414, %v1497
        %v1556 = vadd.f32 %v1415, %v1499
        %v1557 = vadd.f32 %v1416, %v1502
        %v1558 = vadd.f32 %v1417, %v1504
        %v1559 = vadd.f32 %v1418, %v1507
        %v1560 = vadd.f32 %v1419, %v1509
        %v1561 = vadd.f32 %v1420, %v1512
        %v1562 = vadd.f32 %v1421, %v1514
        %v1563 = vadd.f32 %v1422, %v1517
        %v1564 = vadd.f32 %v1423, %v1519
        %v1565 = vadd.f32 %v1424, %v1522
        %v1566 = vadd.f32 %v1425, %v1524
        %v1567 = vadd.f32 %v1426, %v1527
        %v1568 = vadd.f32 %v1427, %v1529
        %v1569 = vadd.f32 %v1428, %v1532
        %v1570 = vadd.f32 %v1429, %v1534
        %v1571 = vadd.f32 %v1430, %v1537
        %v1572 = vadd.f32 %v1431, %v1539
        %v1573 = vpack.c.bf16 %v360, %v359
        %s1574 = scalar_lea.vmem %s1, 48
        %v1575 = vld [vmem:[%s1574] sm:$0xf]
        %v1576 = vld [vmem:[%s1574 + $0x4] sm:$0xf]
        %v1579 = vunpack.c.l.b16 %v1575
        %v1580 = vunpack.c.l.b16 %v1576
        %v1581 = vpack.c.b16 %v1580, %v1579
        %v1584 = vsel %vm566, %v1573, 0
        %1586 = vmatpush.bf16.msra.mxu0 0
        %1587 = vmatpush.bf16.msra.mxu0 0
        %1588 = vmatpush.bf16.msra.mxu0 0
        %1589 = vmatpush.bf16.msra.mxu0 0
        %1590 = vmatpush.bf16.msra.mxu0 0
        %1591 = vmatpush.bf16.msra.mxu0 0
        %1592 = vmatpush.bf16.msra.mxu0 0
        %1593 = vmatpush.bf16.msra.mxu0 %v1581
        %1594 = vmatmul.bf16.gmra.mxu0 %v717
        %v1595 = vpop.f32.mrf.mxu0
        %v1596 = vadd.f32 0.0, %v1595
        %v1597 = vpop.f32.mrf.mxu0
        %v1598 = vadd.f32 0.0, %v1597
        %1599 = vmatmul.bf16.gmra.mxu0 %v720
        %v1600 = vpop.f32.mrf.mxu0
        %v1601 = vadd.f32 0.0, %v1600
        %v1602 = vpop.f32.mrf.mxu0
        %v1603 = vadd.f32 0.0, %v1602
        %1604 = vmatmul.bf16.gmra.mxu0 %v723
        %v1605 = vpop.f32.mrf.mxu0
        %v1606 = vadd.f32 0.0, %v1605
        %v1607 = vpop.f32.mrf.mxu0
        %v1608 = vadd.f32 0.0, %v1607
        %1609 = vmatmul.bf16.gmra.mxu0 %v726
        %v1610 = vpop.f32.mrf.mxu0
        %v1611 = vadd.f32 0.0, %v1610
        %v1612 = vpop.f32.mrf.mxu0
        %v1613 = vadd.f32 0.0, %v1612
        %1614 = vmatmul.bf16.gmra.mxu0 %v729
        %v1615 = vpop.f32.mrf.mxu0
        %v1616 = vadd.f32 0.0, %v1615
        %v1617 = vpop.f32.mrf.mxu0
        %v1618 = vadd.f32 0.0, %v1617
        %1619 = vmatmul.bf16.gmra.mxu0 %v732
        %v1620 = vpop.f32.mrf.mxu0
        %v1621 = vadd.f32 0.0, %v1620
        %v1622 = vpop.f32.mrf.mxu0
        %v1623 = vadd.f32 0.0, %v1622
        %1624 = vmatmul.bf16.gmra.mxu0 %v735
        %v1625 = vpop.f32.mrf.mxu0
        %v1626 = vadd.f32 0.0, %v1625
        %v1627 = vpop.f32.mrf.mxu0
        %v1628 = vadd.f32 0.0, %v1627
        %1629 = vmatmul.bf16.gmra.mxu0 %v738
        %v1630 = vpop.f32.mrf.mxu0
        %v1631 = vadd.f32 0.0, %v1630
        %v1632 = vpop.f32.mrf.mxu0
        %v1633 = vadd.f32 0.0, %v1632
        %1634 = vmatmul.bf16.gmra.mxu0 %v741
        %v1635 = vpop.f32.mrf.mxu0
        %v1636 = vadd.f32 0.0, %v1635
        %v1637 = vpop.f32.mrf.mxu0
        %v1638 = vadd.f32 0.0, %v1637
        %1639 = vmatmul.bf16.gmra.mxu0 %v744
        %v1640 = vpop.f32.mrf.mxu0
        %v1641 = vadd.f32 0.0, %v1640
        %v1642 = vpop.f32.mrf.mxu0
        %v1643 = vadd.f32 0.0, %v1642
        %1644 = vmatmul.bf16.gmra.mxu0 %v747
        %v1645 = vpop.f32.mrf.mxu0
        %v1646 = vadd.f32 0.0, %v1645
        %v1647 = vpop.f32.mrf.mxu0
        %v1648 = vadd.f32 0.0, %v1647
        %1649 = vmatmul.bf16.gmra.mxu0 %v750
        %v1650 = vpop.f32.mrf.mxu0
        %v1651 = vadd.f32 0.0, %v1650
        %v1652 = vpop.f32.mrf.mxu0
        %v1653 = vadd.f32 0.0, %v1652
        %1654 = vmatmul.bf16.gmra.mxu0 %v753
        %v1655 = vpop.f32.mrf.mxu0
        %v1656 = vadd.f32 0.0, %v1655
        %v1657 = vpop.f32.mrf.mxu0
        %v1658 = vadd.f32 0.0, %v1657
        %1659 = vmatmul.bf16.gmra.mxu0 %v756
        %v1660 = vpop.f32.mrf.mxu0
        %v1661 = vadd.f32 0.0, %v1660
        %v1662 = vpop.f32.mrf.mxu0
        %v1663 = vadd.f32 0.0, %v1662
        %1664 = vmatmul.bf16.gmra.mxu0 %v1165
        %v1665 = vpop.f32.mrf.mxu0
        %v1666 = vadd.f32 0.0, %v1665
        %v1667 = vpop.f32.mrf.mxu0
        %v1668 = vadd.f32 0.0, %v1667
        %1669 = vmatmul.bf16.gmra.mxu0 %v1584
        %v1670 = vpop.f32.mrf.mxu0
        %v1671 = vadd.f32 0.0, %v1670
        %v1672 = vpop.f32.mrf.mxu0
        %v1673 = vadd.f32 0.0, %v1672
        %1674 = vdwg.mxu0
        %v1675 = vadd.f32 %v1541, %v1596
        %v1676 = vadd.f32 %v1542, %v1598
        %v1677 = vadd.f32 %v1543, %v1601
        %v1678 = vadd.f32 %v1544, %v1603
        %v1679 = vadd.f32 %v1545, %v1606
        %v1680 = vadd.f32 %v1546, %v1608
        %v1681 = vadd.f32 %v1547, %v1611
        %v1682 = vadd.f32 %v1548, %v1613
        %v1683 = vadd.f32 %v1549, %v1616
        %v1684 = vadd.f32 %v1550, %v1618
        %v1685 = vadd.f32 %v1551, %v1621
        %v1686 = vadd.f32 %v1552, %v1623
        %v1687 = vadd.f32 %v1553, %v1626
        %v1688 = vadd.f32 %v1554, %v1628
        %v1689 = vadd.f32 %v1555, %v1631
        %v1690 = vadd.f32 %v1556, %v1633
        %v1691 = vadd.f32 %v1557, %v1636
        %v1692 = vadd.f32 %v1558, %v1638
        %v1693 = vadd.f32 %v1559, %v1641
        %v1694 = vadd.f32 %v1560, %v1643
        %v1695 = vadd.f32 %v1561, %v1646
        %v1696 = vadd.f32 %v1562, %v1648
        %v1697 = vadd.f32 %v1563, %v1651
        %v1698 = vadd.f32 %v1564, %v1653
        %v1699 = vadd.f32 %v1565, %v1656
        %v1700 = vadd.f32 %v1566, %v1658
        %v1701 = vadd.f32 %v1567, %v1661
        %v1702 = vadd.f32 %v1568, %v1663
        %v1703 = vadd.f32 %v1569, %v1666
        %v1704 = vadd.f32 %v1570, %v1668
        %v1705 = vadd.f32 %v1571, %v1671
        %v1706 = vadd.f32 %v1572, %v1673
        %v1710 = vrot.slane %v359, 1
        %v1711 = vrot.slane %v360, 1
        %v1712 = vsel %vm428, %v1710, %v1711
        %v1713 = vrot.slane %v361, 1
        %v1714 = vsel %vm428, %v1711, %v1713
        %v1717 = vpack.c.bf16 %v1714, %v1712
        %s1718 = scalar_lea.vmem %s1, 56
        %v1719 = vld [vmem:[%s1718] sm:$0xf]
        %v1720 = vld [vmem:[%s1718 + $0x4] sm:$0xf]
        %v1723 = vunpack.c.l.b16 %v1719
        %v1724 = vunpack.c.l.b16 %v1720
        %v1725 = vpack.c.b16 %v1724, %v1723
        %v1728 = vsel %vm566, %v1717, 0
        %1730 = vmatpush.bf16.msra.mxu0 0
        %1731 = vmatpush.bf16.msra.mxu0 0
        %1732 = vmatpush.bf16.msra.mxu0 0
        %1733 = vmatpush.bf16.msra.mxu0 0
        %1734 = vmatpush.bf16.msra.mxu0 0
        %1735 = vmatpush.bf16.msra.mxu0 0
        %1736 = vmatpush.bf16.msra.mxu0 0
        %1737 = vmatpush.bf16.msra.mxu0 %v1725
        %1738 = vmatmul.bf16.gmra.mxu0 %v574
        %v1739 = vpop.f32.mrf.mxu0
        %v1740 = vadd.f32 0.0, %v1739
        %v1741 = vpop.f32.mrf.mxu0
        %v1742 = vadd.f32 0.0, %v1741
        %1743 = vmatmul.bf16.gmra.mxu0 %v577
        %v1744 = vpop.f32.mrf.mxu0
        %v1745 = vadd.f32 0.0, %v1744
        %v1746 = vpop.f32.mrf.mxu0
        %v1747 = vadd.f32 0.0, %v1746
        %1748 = vmatmul.bf16.gmra.mxu0 %v580
        %v1749 = vpop.f32.mrf.mxu0
        %v1750 = vadd.f32 0.0, %v1749
        %v1751 = vpop.f32.mrf.mxu0
        %v1752 = vadd.f32 0.0, %v1751
        %1753 = vmatmul.bf16.gmra.mxu0 %v583
        %v1754 = vpop.f32.mrf.mxu0
        %v1755 = vadd.f32 0.0, %v1754
        %v1756 = vpop.f32.mrf.mxu0
        %v1757 = vadd.f32 0.0, %v1756
        %1758 = vmatmul.bf16.gmra.mxu0 %v586
        %v1759 = vpop.f32.mrf.mxu0
        %v1760 = vadd.f32 0.0, %v1759
        %v1761 = vpop.f32.mrf.mxu0
        %v1762 = vadd.f32 0.0, %v1761
        %1763 = vmatmul.bf16.gmra.mxu0 %v589
        %v1764 = vpop.f32.mrf.mxu0
        %v1765 = vadd.f32 0.0, %v1764
        %v1766 = vpop.f32.mrf.mxu0
        %v1767 = vadd.f32 0.0, %v1766
        %1768 = vmatmul.bf16.gmra.mxu0 %v592
        %v1769 = vpop.f32.mrf.mxu0
        %v1770 = vadd.f32 0.0, %v1769
        %v1771 = vpop.f32.mrf.mxu0
        %v1772 = vadd.f32 0.0, %v1771
        %1773 = vmatmul.bf16.gmra.mxu0 %v595
        %v1774 = vpop.f32.mrf.mxu0
        %v1775 = vadd.f32 0.0, %v1774
        %v1776 = vpop.f32.mrf.mxu0
        %v1777 = vadd.f32 0.0, %v1776
        %1778 = vmatmul.bf16.gmra.mxu0 %v598
        %v1779 = vpop.f32.mrf.mxu0
        %v1780 = vadd.f32 0.0, %v1779
        %v1781 = vpop.f32.mrf.mxu0
        %v1782 = vadd.f32 0.0, %v1781
        %1783 = vmatmul.bf16.gmra.mxu0 %v601
        %v1784 = vpop.f32.mrf.mxu0
        %v1785 = vadd.f32 0.0, %v1784
        %v1786 = vpop.f32.mrf.mxu0
        %v1787 = vadd.f32 0.0, %v1786
        %1788 = vmatmul.bf16.gmra.mxu0 %v604
        %v1789 = vpop.f32.mrf.mxu0
        %v1790 = vadd.f32 0.0, %v1789
        %v1791 = vpop.f32.mrf.mxu0
        %v1792 = vadd.f32 0.0, %v1791
        %1793 = vmatmul.bf16.gmra.mxu0 %v607
        %v1794 = vpop.f32.mrf.mxu0
        %v1795 = vadd.f32 0.0, %v1794
        %v1796 = vpop.f32.mrf.mxu0
        %v1797 = vadd.f32 0.0, %v1796
        %1798 = vmatmul.bf16.gmra.mxu0 %v610
        %v1799 = vpop.f32.mrf.mxu0
        %v1800 = vadd.f32 0.0, %v1799
        %v1801 = vpop.f32.mrf.mxu0
        %v1802 = vadd.f32 0.0, %v1801
        %1803 = vmatmul.bf16.gmra.mxu0 %v613
        %v1804 = vpop.f32.mrf.mxu0
        %v1805 = vadd.f32 0.0, %v1804
        %v1806 = vpop.f32.mrf.mxu0
        %v1807 = vadd.f32 0.0, %v1806
        %1808 = vmatmul.bf16.gmra.mxu0 %v1309
        %v1809 = vpop.f32.mrf.mxu0
        %v1810 = vadd.f32 0.0, %v1809
        %v1811 = vpop.f32.mrf.mxu0
        %v1812 = vadd.f32 0.0, %v1811
        %1813 = vmatmul.bf16.gmra.mxu0 %v1728
        %v1814 = vpop.f32.mrf.mxu0
        %v1815 = vadd.f32 0.0, %v1814
        %v1816 = vpop.f32.mrf.mxu0
        %v1817 = vadd.f32 0.0, %v1816
        %1818 = vdwg.mxu0
        %v1819 = vadd.f32 %v1675, %v1740
        %v1820 = vadd.f32 %v1676, %v1742
        %v1821 = vadd.f32 %v1677, %v1745
        %v1822 = vadd.f32 %v1678, %v1747
        %v1823 = vadd.f32 %v1679, %v1750
        %v1824 = vadd.f32 %v1680, %v1752
        %v1825 = vadd.f32 %v1681, %v1755
        %v1826 = vadd.f32 %v1682, %v1757
        %v1827 = vadd.f32 %v1683, %v1760
        %v1828 = vadd.f32 %v1684, %v1762
        %v1829 = vadd.f32 %v1685, %v1765
        %v1830 = vadd.f32 %v1686, %v1767
        %v1831 = vadd.f32 %v1687, %v1770
        %v1832 = vadd.f32 %v1688, %v1772
        %v1833 = vadd.f32 %v1689, %v1775
        %v1834 = vadd.f32 %v1690, %v1777
        %v1835 = vadd.f32 %v1691, %v1780
        %v1836 = vadd.f32 %v1692, %v1782
        %v1837 = vadd.f32 %v1693, %v1785
        %v1838 = vadd.f32 %v1694, %v1787
        %v1839 = vadd.f32 %v1695, %v1790
        %v1840 = vadd.f32 %v1696, %v1792
        %v1841 = vadd.f32 %v1697, %v1795
        %v1842 = vadd.f32 %v1698, %v1797
        %v1843 = vadd.f32 %v1699, %v1800
        %v1844 = vadd.f32 %v1700, %v1802
        %v1845 = vadd.f32 %v1701, %v1805
        %v1846 = vadd.f32 %v1702, %v1807
        %v1847 = vadd.f32 %v1703, %v1810
        %v1848 = vadd.f32 %v1704, %v1812
        %v1849 = vadd.f32 %v1705, %v1815
        %v1850 = vadd.f32 %v1706, %v1817
        %v1851 = vrot.slane %v359, 2
        %v1852 = vrot.slane %v360, 2
        %v1853 = vsel %vm847, %v1851, %v1852
        %v1854 = vrot.slane %v361, 2
        %v1855 = vsel %vm847, %v1852, %v1854
        %v1858 = vpack.c.bf16 %v1855, %v1853
        %s1859 = scalar_lea.vmem %s1, 64
        %v1860 = vld [vmem:[%s1859] sm:$0xf]
        %v1861 = vld [vmem:[%s1859 + $0x4] sm:$0xf]
        %v1864 = vunpack.c.l.b16 %v1860
        %v1865 = vunpack.c.l.b16 %v1861
        %v1866 = vpack.c.b16 %v1865, %v1864
        %v1869 = vsel %vm566, %v1858, 0
        %1871 = vmatpush.bf16.msra.mxu0 0
        %1872 = vmatpush.bf16.msra.mxu0 0
        %1873 = vmatpush.bf16.msra.mxu0 0
        %1874 = vmatpush.bf16.msra.mxu0 0
        %1875 = vmatpush.bf16.msra.mxu0 0
        %1876 = vmatpush.bf16.msra.mxu0 0
        %1877 = vmatpush.bf16.msra.mxu0 0
        %1878 = vmatpush.bf16.msra.mxu0 %v1866
        %1879 = vmatmul.bf16.gmra.mxu0 %v992
        %v1880 = vpop.f32.mrf.mxu0
        %v1881 = vadd.f32 0.0, %v1880
        %v1882 = vpop.f32.mrf.mxu0
        %v1883 = vadd.f32 0.0, %v1882
        %1884 = vmatmul.bf16.gmra.mxu0 %v995
        %v1885 = vpop.f32.mrf.mxu0
        %v1886 = vadd.f32 0.0, %v1885
        %v1887 = vpop.f32.mrf.mxu0
        %v1888 = vadd.f32 0.0, %v1887
        %1889 = vmatmul.bf16.gmra.mxu0 %v998
        %v1890 = vpop.f32.mrf.mxu0
        %v1891 = vadd.f32 0.0, %v1890
        %v1892 = vpop.f32.mrf.mxu0
        %v1893 = vadd.f32 0.0, %v1892
        %1894 = vmatmul.bf16.gmra.mxu0 %v1001
        %v1895 = vpop.f32.mrf.mxu0
        %v1896 = vadd.f32 0.0, %v1895
        %v1897 = vpop.f32.mrf.mxu0
        %v1898 = vadd.f32 0.0, %v1897
        %1899 = vmatmul.bf16.gmra.mxu0 %v1004
        %v1900 = vpop.f32.mrf.mxu0
        %v1901 = vadd.f32 0.0, %v1900
        %v1902 = vpop.f32.mrf.mxu0
        %v1903 = vadd.f32 0.0, %v1902
        %1904 = vmatmul.bf16.gmra.mxu0 %v1007
        %v1905 = vpop.f32.mrf.mxu0
        %v1906 = vadd.f32 0.0, %v1905
        %v1907 = vpop.f32.mrf.mxu0
        %v1908 = vadd.f32 0.0, %v1907
        %1909 = vmatmul.bf16.gmra.mxu0 %v1010
        %v1910 = vpop.f32.mrf.mxu0
        %v1911 = vadd.f32 0.0, %v1910
        %v1912 = vpop.f32.mrf.mxu0
        %v1913 = vadd.f32 0.0, %v1912
        %1914 = vmatmul.bf16.gmra.mxu0 %v1013
        %v1915 = vpop.f32.mrf.mxu0
        %v1916 = vadd.f32 0.0, %v1915
        %v1917 = vpop.f32.mrf.mxu0
        %v1918 = vadd.f32 0.0, %v1917
        %1919 = vmatmul.bf16.gmra.mxu0 %v1016
        %v1920 = vpop.f32.mrf.mxu0
        %v1921 = vadd.f32 0.0, %v1920
        %v1922 = vpop.f32.mrf.mxu0
        %v1923 = vadd.f32 0.0, %v1922
        %1924 = vmatmul.bf16.gmra.mxu0 %v1019
        %v1925 = vpop.f32.mrf.mxu0
        %v1926 = vadd.f32 0.0, %v1925
        %v1927 = vpop.f32.mrf.mxu0
        %v1928 = vadd.f32 0.0, %v1927
        %1929 = vmatmul.bf16.gmra.mxu0 %v1022
        %v1930 = vpop.f32.mrf.mxu0
        %v1931 = vadd.f32 0.0, %v1930
        %v1932 = vpop.f32.mrf.mxu0
        %v1933 = vadd.f32 0.0, %v1932
        %1934 = vmatmul.bf16.gmra.mxu0 %v1025
        %v1935 = vpop.f32.mrf.mxu0
        %v1936 = vadd.f32 0.0, %v1935
        %v1937 = vpop.f32.mrf.mxu0
        %v1938 = vadd.f32 0.0, %v1937
        %1939 = vmatmul.bf16.gmra.mxu0 %v1028
        %v1940 = vpop.f32.mrf.mxu0
        %v1941 = vadd.f32 0.0, %v1940
        %v1942 = vpop.f32.mrf.mxu0
        %v1943 = vadd.f32 0.0, %v1942
        %1944 = vmatmul.bf16.gmra.mxu0 %v1031
        %v1945 = vpop.f32.mrf.mxu0
        %v1946 = vadd.f32 0.0, %v1945
        %v1947 = vpop.f32.mrf.mxu0
        %v1948 = vadd.f32 0.0, %v1947
        %1949 = vmatmul.bf16.gmra.mxu0 %v1450
        %v1950 = vpop.f32.mrf.mxu0
        %v1951 = vadd.f32 0.0, %v1950
        %v1952 = vpop.f32.mrf.mxu0
        %v1953 = vadd.f32 0.0, %v1952
        %1954 = vmatmul.bf16.gmra.mxu0 %v1869
        %v1955 = vpop.f32.mrf.mxu0
        %v1956 = vadd.f32 0.0, %v1955
        %v1957 = vpop.f32.mrf.mxu0
        %v1958 = vadd.f32 0.0, %v1957
        %1959 = vdwg.mxu0
        %v1960 = vadd.f32 %v1819, %v1881
        %v1961 = vadd.f32 %v1820, %v1883
        %v1962 = vadd.f32 %v1821, %v1886
        %v1963 = vadd.f32 %v1822, %v1888
        %v1964 = vadd.f32 %v1823, %v1891
        %v1965 = vadd.f32 %v1824, %v1893
        %v1966 = vadd.f32 %v1825, %v1896
        %v1967 = vadd.f32 %v1826, %v1898
        %v1968 = vadd.f32 %v1827, %v1901
        %v1969 = vadd.f32 %v1828, %v1903
        %v1970 = vadd.f32 %v1829, %v1906
        %v1971 = vadd.f32 %v1830, %v1908
        %v1972 = vadd.f32 %v1831, %v1911
        %v1973 = vadd.f32 %v1832, %v1913
        %v1974 = vadd.f32 %v1833, %v1916
        %v1975 = vadd.f32 %v1834, %v1918
        %v1976 = vadd.f32 %v1835, %v1921
        %v1977 = vadd.f32 %v1836, %v1923
        %v1978 = vadd.f32 %v1837, %v1926
        %v1979 = vadd.f32 %v1838, %v1928
        %v1980 = vadd.f32 %v1839, %v1931
        %v1981 = vadd.f32 %v1840, %v1933
        %v1982 = vadd.f32 %v1841, %v1936
        %v1983 = vadd.f32 %v1842, %v1938
        %v1984 = vadd.f32 %v1843, %v1941
        %v1985 = vadd.f32 %v1844, %v1943
        %v1986 = vadd.f32 %v1845, %v1946
        %v1987 = vadd.f32 %v1846, %v1948
        %v1988 = vadd.f32 %v1847, %v1951
        %v1989 = vadd.f32 %v1848, %v1953
        %v1990 = vadd.f32 %v1849, %v1956
        %v1991 = vadd.f32 %v1850, %v1958
        %v1992 = vld [vmem:[#allocation2] sm:$0x1]
        %v1994 = vperm.slane %v1992, 0
        %v1996 = vadd.f32 %v1960, %v1994
        %v1997 = vadd.f32 %v1961, %v1994
        %v1998 = vadd.f32 %v1962, %v1994
        %v1999 = vadd.f32 %v1963, %v1994
        %v2000 = vadd.f32 %v1964, %v1994
        %v2001 = vadd.f32 %v1965, %v1994
        %v2002 = vadd.f32 %v1966, %v1994
        %v2003 = vadd.f32 %v1967, %v1994
        %v2004 = vadd.f32 %v1968, %v1994
        %v2005 = vadd.f32 %v1969, %v1994
        %v2006 = vadd.f32 %v1970, %v1994
        %v2007 = vadd.f32 %v1971, %v1994
        %v2008 = vadd.f32 %v1972, %v1994
        %v2009 = vadd.f32 %v1973, %v1994
        %v2010 = vadd.f32 %v1974, %v1994
        %v2011 = vadd.f32 %v1975, %v1994
        %v2012 = vadd.f32 %v1976, %v1994
        %v2013 = vadd.f32 %v1977, %v1994
        %v2014 = vadd.f32 %v1978, %v1994
        %v2015 = vadd.f32 %v1979, %v1994
        %v2016 = vadd.f32 %v1980, %v1994
        %v2017 = vadd.f32 %v1981, %v1994
        %v2018 = vadd.f32 %v1982, %v1994
        %v2019 = vadd.f32 %v1983, %v1994
        %v2020 = vadd.f32 %v1984, %v1994
        %v2021 = vadd.f32 %v1985, %v1994
        %v2022 = vadd.f32 %v1986, %v1994
        %v2023 = vadd.f32 %v1987, %v1994
        %v2024 = vadd.f32 %v1988, %v1994
        %v2025 = vadd.f32 %v1989, %v1994
        %v2026 = vadd.f32 %v1990, %v1994
        %v2027 = vadd.f32 %v1991, %v1994
        %v2028 = vmax.f32 %v1996, 0.0
        %v2029 = vmax.f32 %v1997, 0.0
        %v2030 = vmax.f32 %v1998, 0.0
        %v2031 = vmax.f32 %v1999, 0.0
        %v2032 = vmax.f32 %v2000, 0.0
        %v2033 = vmax.f32 %v2001, 0.0
        %v2034 = vmax.f32 %v2002, 0.0
        %v2035 = vmax.f32 %v2003, 0.0
        %v2036 = vmax.f32 %v2004, 0.0
        %v2037 = vmax.f32 %v2005, 0.0
        %v2038 = vmax.f32 %v2006, 0.0
        %v2039 = vmax.f32 %v2007, 0.0
        %v2040 = vmax.f32 %v2008, 0.0
        %v2041 = vmax.f32 %v2009, 0.0
        %v2042 = vmax.f32 %v2010, 0.0
        %v2043 = vmax.f32 %v2011, 0.0
        %v2044 = vmax.f32 %v2012, 0.0
        %v2045 = vmax.f32 %v2013, 0.0
        %v2046 = vmax.f32 %v2014, 0.0
        %v2047 = vmax.f32 %v2015, 0.0
        %v2048 = vmax.f32 %v2016, 0.0
        %v2049 = vmax.f32 %v2017, 0.0
        %v2050 = vmax.f32 %v2018, 0.0
        %v2051 = vmax.f32 %v2019, 0.0
        %v2052 = vmax.f32 %v2020, 0.0
        %v2053 = vmax.f32 %v2021, 0.0
        %v2054 = vmax.f32 %v2022, 0.0
        %v2055 = vmax.f32 %v2023, 0.0
        %v2056 = vmax.f32 %v2024, 0.0
        %v2057 = vmax.f32 %v2025, 0.0
        %v2058 = vmax.f32 %v2026, 0.0
        %v2059 = vmax.f32 %v2027, 0.0
        %v2060 = vld [vmem:[%s3] sm:$0xf]
        %v2061 = vld [vmem:[%s3 + $0x4] sm:$0xf]
        %v2062 = vpack.c.bf16 %v2029, %v2028
        %v2063 = vpack.c.bf16 %v2031, %v2030
        %v2064 = vpack.c.bf16 %v2033, %v2032
        %v2065 = vpack.c.bf16 %v2035, %v2034
        %v2066 = vpack.c.bf16 %v2037, %v2036
        %v2067 = vpack.c.bf16 %v2039, %v2038
        %v2068 = vpack.c.bf16 %v2041, %v2040
        %v2069 = vpack.c.bf16 %v2043, %v2042
        %v2070 = vpack.c.bf16 %v2045, %v2044
        %v2071 = vpack.c.bf16 %v2047, %v2046
        %v2072 = vpack.c.bf16 %v2049, %v2048
        %v2073 = vpack.c.bf16 %v2051, %v2050
        %v2074 = vpack.c.bf16 %v2053, %v2052
        %v2075 = vpack.c.bf16 %v2055, %v2054
        %v2076 = vpack.c.bf16 %v2057, %v2056
        %v2077 = vpack.c.bf16 %v2059, %v2058
        %v2078 = vld [vmem:[%s4] sm:$0xff]
        %v2079 = vld [vmem:[%s4 + $0x8] sm:$0x7f]
        %2081 = vset.pattern.permute.xlu0 0
        %2082 = vperm.xlu0 %2081, %v2078
        %v2083 = vpop.permute.xlu0 %2082
        %2086 = vset.pattern.permute.xlu0 0
        %2087 = vperm.xlu0 %2086, %v2079
        %v2088 = vpop.permute.xlu0 %2087
        %v2092 = vunpack.c.l.b16 %v2060
        %v2093 = vunpack.c.l.b16 %v2061
        %v2094 = vpack.c.b16 %v2093, %v2092
        %v2096 = vsel %vm566, %v2094, 0
        %v2099 = vsel %vm566, %v2062, 0
        %v2102 = vsel %vm566, %v2063, 0
        %v2105 = vsel %vm566, %v2064, 0
        %v2108 = vsel %vm566, %v2065, 0
        %v2111 = vsel %vm566, %v2066, 0
        %v2114 = vsel %vm566, %v2067, 0
        %v2117 = vsel %vm566, %v2068, 0
        %v2120 = vsel %vm566, %v2069, 0
        %v2123 = vsel %vm566, %v2070, 0
        %v2126 = vsel %vm566, %v2071, 0
        %v2129 = vsel %vm566, %v2072, 0
        %v2132 = vsel %vm566, %v2073, 0
        %v2135 = vsel %vm566, %v2074, 0
        %v2138 = vsel %vm566, %v2075, 0
        %v2141 = vsel %vm566, %v2076, 0
        %v2144 = vsel %vm566, %v2077, 0
        %2146 = vmatpush.bf16.xpose.msra.mxu0 %v2120
        %2147 = vmatpush.bf16.xpose.msra.mxu0 %v2117
        %2148 = vmatpush.bf16.xpose.msra.mxu0 %v2114
        %2149 = vmatpush.bf16.xpose.msra.mxu0 %v2111
        %2150 = vmatpush.bf16.xpose.msra.mxu0 %v2108
        %2151 = vmatpush.bf16.xpose.msra.mxu0 %v2105
        %2152 = vmatpush.bf16.xpose.msra.mxu0 %v2102
        %2153 = vmatpush.bf16.xpose.msra.mxu0 %v2099
        %2154 = vmatmul.bf16.gmra.mxu0 %v2096
        %v2155 = vpop.f32.mrf.mxu0
        %v2156 = vadd.f32 %v2083, %v2155
        %v2157 = vpop.f32.mrf.mxu0
        %v2158 = vadd.f32 %v2088, %v2157
        %2159 = vdwg.mxu0
        %2160 = vmatpush.bf16.xpose.msra.mxu0 %v2144
        %2161 = vmatpush.bf16.xpose.msra.mxu0 %v2141
        %2162 = vmatpush.bf16.xpose.msra.mxu0 %v2138
        %2163 = vmatpush.bf16.xpose.msra.mxu0 %v2135
        %2164 = vmatpush.bf16.xpose.msra.mxu0 %v2132
        %2165 = vmatpush.bf16.xpose.msra.mxu0 %v2129
        %2166 = vmatpush.bf16.xpose.msra.mxu0 %v2126
        %2167 = vmatpush.bf16.xpose.msra.mxu0 %v2123
        %2168 = vmatmul.bf16.gmra.mxu0 %v2096
        %v2169 = vpop.f32.mrf.mxu0
        %v2170 = vadd.f32 %v2083, %v2169
        %v2171 = vpop.f32.mrf.mxu0
        %v2172 = vadd.f32 %v2088, %v2171
        %2173 = vdwg.mxu0
        %v2174 = vsub.f32 0.0, %v2156
        %v2175 = vsub.f32 0.0, %v2170
        %v2176 = vmul.f32 %v2174, 1.442695
        %v2177 = vpow.pop %v2176
        %v2178 = vmul.f32 %v2175, 1.442695
        %v2179 = vpow.pop %v2178
        %v2180 = vadd.f32 %v2177, 1.0
        %v2181 = vadd.f32 %v2179, 1.0
        %v2182 = vrcp.pop %v2180
        %v2183 = vrcp.pop %v2181
        %v2186 = vrot.slane %v2183, 4
        %vm2187 = vcmask 1043456
        %v2188 = vsel %vm2187, %v2182, %v2186
        %2190 = vst [vmem:[%s301] sm:$0x77] %v2188
        %v2191 = vld [vmem:[%s5] sm:$0xff]
        %v2193 = vrot.slane %v2191, 6
        %v2195 = vsub.f32 %v2191, %v2193
        %v2196 = vmul.f32 %v2195, 0.5
        %v2198 = vrot.slane %v2196, 6
        %v2199 = vrot.slane %v2198, 4
        %v2201 = vadd.f32 %v2191, %v2199
        %v2202 = vmin.f32 %v2156, 4.1351666
        %v2203 = vmin.f32 %v2170, 4.1351666
        %v2205 = vperm.slane %v2195, 2
        %v2206 = vperm.slane %v2195, 6
        %v2209 = vmul.f32 %v2156, %v2205
        %v2210 = vmul.f32 %v2170, %v2206
        %v2212 = vperm.slane %v2201, 0
        %v2213 = vperm.slane %v2201, 4
        %v2216 = vadd.f32 %v2209, %v2212
        %v2217 = vadd.f32 %v2210, %v2213
        %v2218 = vperm.slane %v2195, 3
        %v2219 = vperm.slane %v2195, 7
        %v2222 = vmul.f32 %v2156, %v2218
        %v2223 = vmul.f32 %v2170, %v2219
        %v2224 = vperm.slane %v2201, 1
        %v2225 = vperm.slane %v2201, 5
        %v2228 = vadd.f32 %v2222, %v2224
        %v2229 = vadd.f32 %v2223, %v2225
        %v2230 = vmul.f32 %v2202, 1.442695
        %v2231 = vpow.pop %v2230
        %v2232 = vmul.f32 %v2203, 1.442695
        %v2233 = vpow.pop %v2232
        %v2234 = vmul.f32 %v2231, %v2205
        %v2235 = vmul.f32 %v2233, %v2206
        %v2236 = vmul.f32 %v2231, %v2218
        %v2237 = vmul.f32 %v2233, %v2219
        %v2238 = vmul.f32 %v2234, 0.5
        %v2239 = vmul.f32 %v2235, 0.5
        %v2242 = vrot.slane %v2238, 2
        %v2243 = vrot.slane %v2239, 2
        %v2246 = vsub.f32 %v2216, %v2242
        %v2247 = vsub.f32 %v2217, %v2243
        %v2248 = vmul.f32 %v2236, 0.5
        %v2249 = vmul.f32 %v2237, 0.5
        %v2252 = vrot.slane %v2248, 2
        %v2253 = vrot.slane %v2249, 2
        %v2256 = vsub.f32 %v2228, %v2252
        %v2257 = vsub.f32 %v2229, %v2253
        %v2258 = vadd.f32 %v2216, %v2242
        %v2259 = vadd.f32 %v2217, %v2243
        %v2260 = vadd.f32 %v2228, %v2252
        %v2261 = vadd.f32 %v2229, %v2253
        %v2264 = vrot.slane %v2246, 3
        %v2265 = vrot.slane %v2247, 3
        %v2270 = vrot.slane %v2256, 3
        %v2271 = vrot.slane %v2257, 3
        %v2276 = vrot.slane %v2258, 1
        %v2277 = vrot.slane %v2259, 1
        %v2282 = vrot.slane %v2260, 1
        %v2283 = vrot.slane %v2261, 1
        %vm2286 = vcmask 1040384
        %v2287 = vsel %vm2286, %v2264, %v2270
        %v2288 = vsel %vm2286, %v2265, %v2271
        %vm2289 = vcmask 1041408
        %v2290 = vsel %vm2289, %v2287, %v2276
        %v2291 = vsel %vm2289, %v2288, %v2277
        %vm2292 = vcmask 1042432
        %v2293 = vsel %vm2292, %v2290, %v2282
        %v2294 = vsel %vm2292, %v2291, %v2283
        %v2297 = vrot.slane %v2294, 4
        %v2298 = vsel %vm2187, %v2293, %v2297
        %2300 = vst [vmem:[%s306] sm:$0xff] %v2298
        %v2301 = vld [vmem:[%s5 + $0x8] sm:$0xff]
        %v2303 = vrot.slane %v2301, 6
        %v2305 = vsub.f32 %v2301, %v2303
        %v2306 = vmul.f32 %v2305, 0.5
        %v2308 = vrot.slane %v2306, 6
        %v2309 = vrot.slane %v2308, 4
        %v2311 = vadd.f32 %v2301, %v2309
        %v2312 = vmin.f32 %v2158, 4.1351666
        %v2313 = vmin.f32 %v2172, 4.1351666
        %v2315 = vperm.slane %v2305, 2
        %v2316 = vperm.slane %v2305, 6
        %v2319 = vmul.f32 %v2156, %v2315
        %v2320 = vmul.f32 %v2170, %v2316
        %v2322 = vperm.slane %v2311, 0
        %v2323 = vperm.slane %v2311, 4
        %v2326 = vadd.f32 %v2319, %v2322
        %v2327 = vadd.f32 %v2320, %v2323
        %v2328 = vperm.slane %v2305, 3
        %v2329 = vperm.slane %v2305, 7
        %v2332 = vmul.f32 %v2158, %v2328
        %v2333 = vmul.f32 %v2172, %v2329
        %v2334 = vperm.slane %v2311, 1
        %v2335 = vperm.slane %v2311, 5
        %v2338 = vadd.f32 %v2332, %v2334
        %v2339 = vadd.f32 %v2333, %v2335
        %v2340 = vmul.f32 %v2312, 1.442695
        %v2341 = vpow.pop %v2340
        %v2342 = vmul.f32 %v2313, 1.442695
        %v2343 = vpow.pop %v2342
        %v2344 = vmul.f32 %v2341, %v2315
        %v2345 = vmul.f32 %v2343, %v2316
        %v2346 = vmul.f32 %v2341, %v2328
        %v2347 = vmul.f32 %v2343, %v2329
        %v2348 = vmul.f32 %v2344, 0.5
        %v2349 = vmul.f32 %v2345, 0.5
        %v2352 = vrot.slane %v2348, 2
        %v2353 = vrot.slane %v2349, 2
        %v2356 = vsub.f32 %v2326, %v2352
        %v2357 = vsub.f32 %v2327, %v2353
        %v2358 = vmul.f32 %v2346, 0.5
        %v2359 = vmul.f32 %v2347, 0.5
        %v2362 = vrot.slane %v2358, 2
        %v2363 = vrot.slane %v2359, 2
        %v2366 = vsub.f32 %v2338, %v2362
        %v2367 = vsub.f32 %v2339, %v2363
        %v2368 = vadd.f32 %v2326, %v2352
        %v2369 = vadd.f32 %v2327, %v2353
        %v2370 = vadd.f32 %v2338, %v2362
        %v2371 = vadd.f32 %v2339, %v2363
        %v2374 = vrot.slane %v2356, 7
        %v2375 = vrot.slane %v2357, 7
        %v2380 = vrot.slane %v2366, 7
        %v2381 = vrot.slane %v2367, 7
        %v2386 = vrot.slane %v2368, 5
        %v2387 = vrot.slane %v2369, 5
        %v2392 = vrot.slane %v2370, 5
        %v2393 = vrot.slane %v2371, 5
        %v2396 = vsel %vm2286, %v2374, %v2380
        %v2397 = vsel %vm2286, %v2375, %v2381
        %v2398 = vsel %vm2289, %v2396, %v2386
        %v2399 = vsel %vm2289, %v2397, %v2387
        %v2400 = vsel %vm2292, %v2398, %v2392
        %v2401 = vsel %vm2292, %v2399, %v2393
        %v2404 = vrot.slane %v2401, 4
        %v2405 = vsel %vm2187, %v2400, %v2404
        %2407 = vst [vmem:[%s306 + $0x8] sm:$0xff] %v2405
        %v2408 = vld [vmem:[%s5 + $0x10] sm:$0xff]
        %v2410 = vrot.slane %v2408, 6
        %v2412 = vsub.f32 %v2408, %v2410
        %v2413 = vmul.f32 %v2412, 0.5
        %v2415 = vrot.slane %v2413, 6
        %v2416 = vrot.slane %v2415, 4
        %v2418 = vadd.f32 %v2408, %v2416
        %v2420 = vperm.slane %v2412, 2
        %v2421 = vperm.slane %v2412, 6
        %v2424 = vmul.f32 %v2158, %v2420
        %v2425 = vmul.f32 %v2172, %v2421
        %v2427 = vperm.slane %v2418, 0
        %v2428 = vperm.slane %v2418, 4
        %v2431 = vadd.f32 %v2424, %v2427
        %v2432 = vadd.f32 %v2425, %v2428
        %v2433 = vperm.slane %v2412, 3
        %v2434 = vperm.slane %v2412, 7
        %v2437 = vmul.f32 %v2158, %v2433
        %v2438 = vmul.f32 %v2172, %v2434
        %v2439 = vperm.slane %v2418, 1
        %v2440 = vperm.slane %v2418, 5
        %v2443 = vadd.f32 %v2437, %v2439
        %v2444 = vadd.f32 %v2438, %v2440
        %v2445 = vmul.f32 %v2341, %v2420
        %v2446 = vmul.f32 %v2343, %v2421
        %v2447 = vmul.f32 %v2341, %v2433
        %v2448 = vmul.f32 %v2343, %v2434
        %v2449 = vmul.f32 %v2445, 0.5
        %v2450 = vmul.f32 %v2446, 0.5
        %v2453 = vrot.slane %v2449, 2
        %v2454 = vrot.slane %v2450, 2
        %v2457 = vsub.f32 %v2431, %v2453
        %v2458 = vsub.f32 %v2432, %v2454
        %v2459 = vmul.f32 %v2447, 0.5
        %v2460 = vmul.f32 %v2448, 0.5
        %v2463 = vrot.slane %v2459, 2
        %v2464 = vrot.slane %v2460, 2
        %v2467 = vsub.f32 %v2443, %v2463
        %v2468 = vsub.f32 %v2444, %v2464
        %v2469 = vadd.f32 %v2431, %v2453
        %v2470 = vadd.f32 %v2432, %v2454
        %v2471 = vadd.f32 %v2443, %v2463
        %v2472 = vadd.f32 %v2444, %v2464
        %v2475 = vrot.slane %v2457, 3
        %v2476 = vrot.slane %v2458, 3
        %v2481 = vrot.slane %v2467, 3
        %v2482 = vrot.slane %v2468, 3
        %v2487 = vrot.slane %v2469, 1
        %v2488 = vrot.slane %v2470, 1
        %v2493 = vrot.slane %v2471, 1
        %v2494 = vrot.slane %v2472, 1
        %v2497 = vsel %vm2286, %v2475, %v2481
        %v2498 = vsel %vm2286, %v2476, %v2482
        %v2499 = vsel %vm2289, %v2497, %v2487
        %v2500 = vsel %vm2289, %v2498, %v2488
        %v2501 = vsel %vm2292, %v2499, %v2493
        %v2502 = vsel %vm2292, %v2500, %v2494
        %v2505 = vrot.slane %v2502, 4
        %v2506 = vsel %vm2187, %v2501, %v2505
        %2508 = vst [vmem:[%s306 + $0x10] sm:$0xff] %v2506
        %p2509 = scmp.lt.s32.totalorder %s20, 1
        %s2510 = scalar_select %p2509, %s20, 1
        %s2511 = smul.addr %s2510, 2
        %s2512 = smul.addr %s2511, 4
        %s2513 = scalar_lea.vmem %s6, %s2512
        %p2514 = scmp.lt.s32.totalorder %s20, 1
        %s2515 = scalar_select %p2514, %s20, 1
        %s2516 = smul.addr %s2515, 6
        %s2517 = smul.addr %s2516, 4
        %s2518 = scalar_lea.vmem %s7, %s2517
        // Predicated region
        $region49: #{rpn_forward.1} parent=43 // pred_check
          %p2519 = pneg %p169
        $region50: #{rpn_forward.1} parent=43 // pred_check_branch
          %2521 = sbr.rel (%p2519) target = $region52
        $region51: #{rpn_forward.1} parent=43 // pred_region
          _
        $region52: #{rpn_forward.1} parent=43 // pred_fallthru
          _
        // Predicated region
        $region53: #{rpn_forward.1} parent=43 // pred_check
          %p2522 = pneg %p195
        $region54: #{rpn_forward.1} parent=43 // pred_check_branch
          %2524 = sbr.rel (%p2522) target = $region56
        $region55: #{rpn_forward.1} parent=43 // pred_region
          _
        $region56: #{rpn_forward.1} parent=43 // pred_fallthru
          _
      $region44: #{rpn_forward.1} parent=5 // pred_fallthru
        _
      %p2525 = scmp.le.s32.totalorder 2, %s15
      // Predicated region
      $region57: #{rpn_forward.1} parent=5 // pred_check
        %p2526 = pneg %p2525
      $region58: #{rpn_forward.1} parent=5 // pred_check_branch
        %2528 = sbr.rel (%p2526) target = $region60
      $region59: #{rpn_forward.1} parent=5 // pred_region
        %s2529 = ssub.s32 %s15, 2
        // Predicated region
        $region61: #{rpn_forward.1} parent=59 // pred_check
          %p2530 = pneg %p175
        $region62: #{rpn_forward.1} parent=59 // pred_check_branch
          %2532 = sbr.rel (%p2530) target = $region64
        $region63: #{rpn_forward.1} parent=59 // pred_region
          %p2533 = scmp.lt.s32.totalorder %s21, 1
          %s2534 = scalar_select %p2533, %s21, 1
          %s2535 = smul.addr %s2534, 2
          %s2536 = smul.addr %s2535, 4
          %s2537 = scalar_lea.vmem %s6, %s2536
        $region64: #{rpn_forward.1} parent=59 // pred_fallthru
          _
        // Predicated region
        $region65: #{rpn_forward.1} parent=59 // pred_check
          %p2538 = pneg %p201
        $region66: #{rpn_forward.1} parent=59 // pred_check_branch
          %2540 = sbr.rel (%p2538) target = $region68
        $region67: #{rpn_forward.1} parent=59 // pred_region
          %p2541 = scmp.lt.s32.totalorder %s21, 1
          %s2542 = scalar_select %p2541, %s21, 1
          %s2543 = smul.addr %s2542, 6
          %s2544 = smul.addr %s2543, 4
          %s2545 = scalar_lea.vmem %s7, %s2544
        $region68: #{rpn_forward.1} parent=59 // pred_fallthru
          _
      $region60: #{rpn_forward.1} parent=5 // pred_fallthru
        _
    $region6: #{rpn_forward.1} parent=1 // loop_footer
      %s19 = sadd.s32 1, %s15
    $region7: #{rpn_forward.1} parent=1 // loop_footer_branch
      %14 = sbr.rel target = $region3
    $region8: #{rpn_forward.1} parent=1 // loop_exit
      _
    %2546 = vsyncpa [#allocation3], 1
    %s2547 = scalar_lea.sflag [#allocation3], 1
    %2548 = vsyncpa %s2547, 1

</llo_original>
